<compile_context>
chip_gen: v7x
topology: tpu7x:2x2x1
jax: 0.10.0
libtpu: 0.0.40
codegen_flags: <defaults>
</compile_context>

<pallas_src>
import jax
import jax.numpy as jnp
from jax import lax
from jax.experimental import pallas as pl
from jax.experimental.pallas import tpu as pltpu


def _window_attention_kernel(x_ref, gamma_ref, beta_ref, wqkv_ref, wout_ref,
                             bias_ref, o_ref):
    # Shapes (static at trace time):
    #   x_ref    : (rows, d)  f32   tokens of `windows_per_block` whole windows
    #   gamma/beta: (1, d)    f32   LayerNorm params
    #   wqkv_ref : (d, 3d)    bf16  resident weight
    #   wout_ref : (d, d)     bf16  resident weight
    #   bias_ref : (heads, rows, rows) f32  block-diag rel-pos bias + mask
    heads = bias_ref.shape[0]
    rows, d = x_ref.shape
    dh = d // heads
    scale = float(dh) ** -0.5

    # ---- LayerNorm over the feature axis, all in f32 (eps matches F.layer_norm)
    x = x_ref[...]
    mu = jnp.mean(x, axis=-1, keepdims=True)
    xc = x - mu
    var = jnp.mean(xc * xc, axis=-1, keepdims=True)
    xn = xc * lax.rsqrt(var + 1e-5) * gamma_ref[...] + beta_ref[...]

    # ---- fused QKV projection: one lane-dense MXU matmul, bf16 x bf16 -> f32
    qkv = jnp.dot(xn.astype(jnp.bfloat16), wqkv_ref[...],
                  preferred_element_type=jnp.float32)          # (rows, 3d)

    # ---- packed block-diagonal attention, one pass per head (small unroll) --
    ctx_heads = []
    for h in range(heads):
        c0 = h * dh
        q = (qkv[:, c0:c0 + dh] * scale).astype(jnp.bfloat16)        # (rows, dh)
        k = qkv[:, d + c0:d + c0 + dh].astype(jnp.bfloat16)          # (rows, dh)
        v = qkv[:, 2 * d + c0:2 * d + c0 + dh].astype(jnp.bfloat16)  # (rows, dh)

        # q @ k^T over ALL packed windows at once (block-diag mask in bias)
        sim = lax.dot_general(q, k, (((1,), (1,)), ((), ())),
                              preferred_element_type=jnp.float32)     # (rows, rows)
        sim = sim + bias_ref[h]
        # numerically-stable softmax in f32; masked entries underflow to 0
        sim = sim - jnp.max(sim, axis=-1, keepdims=True)
        p = jnp.exp(sim)
        inv_den = pl.reciprocal(jnp.sum(p, axis=-1, keepdims=True), approx=True)
        attn = (p * inv_den).astype(jnp.bfloat16)

        ctx_heads.append(jnp.dot(attn, v, preferred_element_type=jnp.float32))

    # keep context in vregs; one lane-dense concat + output projection + store
    ctx = jnp.concatenate(ctx_heads, axis=-1)                   # (rows, d) f32
    o_ref[...] = jnp.dot(ctx.astype(jnp.bfloat16), wout_ref[...],
                         preferred_element_type=jnp.float32).astype(o_ref.dtype)


def _vmem_need(rows, d, heads):
    """Rough per-kernel VMEM footprint (double buffering everywhere)."""
    bf16, f32 = 2, 4
    return (2 * 2 * rows * d * f32                       # x tile + out tile, 2 bufs each
            + 2 * (d * 3 * d + d * d) * bf16             # resident bf16 weights (x2 bufs)
            + 2 * (heads * rows * rows + 2 * d) * f32    # bias mask + LN params (x2 bufs)
            + (6 << 20))                                  # spill / compiler slack


def _choose_block(num_windows, n, d, heads, vmem_cap):
    """Pick windows_per_block: big tiles (target 128-512 rows), even grid if cheap."""
    total_rows = num_windows * n
    best_even = None   # (rows, wpb, grid_len)
    best_any = None
    for wpb in range(1, num_windows + 1):
        if num_windows % wpb:
            continue
        rows = wpb * n
        if rows % 8 and rows != total_rows:
            continue                                   # illegal BlockSpec row tile
        if rows > 512 and rows != total_rows:
            continue                                   # cap (vreg pressure / mask size)
        if _vmem_need(rows, d, heads) > vmem_cap - (4 << 20):
            continue
        grid_len = num_windows // wpb
        cand = (rows, wpb, grid_len)
        if best_any is None or rows > best_any[0]:
            best_any = cand
        if grid_len % 2 == 0 and (best_even is None or rows > best_even[0]):
            best_even = cand
    if best_any is None:
        # TODO(synk): nothing fits the VMEM cap; fall back to one full block.
        return num_windows, total_rows, 1
    # Prefer an even grid (v7x has 2 TensorCores) unless it costs >2x tile size.
    if best_even is not None and 2 * best_even[0] >= best_any[0]:
        rows, wpb, grid_len = best_even
    else:
        rows, wpb, grid_len = best_any
    return wpb, rows, grid_len


def window_attention(x, gamma, beta, w_qkv, w_out, rel_bias_hij, *, dim_head=32):
    """Fused windowed attention.

    x            : (batch, height, width, win_h, win_w, dim) float32
    gamma, beta  : (dim,)            LayerNorm parameters
    w_qkv        : (dim, 3*dim)      to_qkv weight (x @ w_qkv)
    w_out        : (dim, dim)        to_out weight (ctx @ w_out)
    rel_bias_hij : (heads, n, n)     gathered relative-position bias, n = win_h*win_w
    """
    b, hgt, wid, w1, w2, d = x.shape
    assert d % dim_head == 0
    heads = d // dim_head
    n = w1 * w2
    num_windows = b * hgt * wid
    assert rel_bias_hij.shape == (heads, n, n)

    # Real per-TensorCore VMEM capacity (64 MiB on v7x, 128 MiB on v5e/v6e).
    try:
        vmem_cap = int(pltpu.get_tpu_info().vmem_capacity_bytes)
    except Exception:
        vmem_cap = 64 << 20          # conservative fallback (v7x per-TC)

    windows_per_block, tile_rows, grid_len = _choose_block(
        num_windows, n, d, heads, vmem_cap)
    grid = (grid_len,)

    # ---- host-side prep -----------------------------------------------------
    x2 = x.reshape(num_windows * n, d)
    gamma2 = gamma.reshape(1, d).astype(jnp.float32)
    beta2 = beta.reshape(1, d).astype(jnp.float32)
    w_qkv_b = w_qkv.astype(jnp.bfloat16)
    w_out_b = w_out.astype(jnp.bfloat16)

    # Block-diagonal bias + mask over the packed windows of one block.
    # Off-window entries get a large FINITE negative (not -inf) so the
    # max-subtract in the softmax never produces inf - inf = NaN.
    diag = jnp.kron(jnp.eye(windows_per_block, dtype=jnp.float32),
                    jnp.ones((n, n), jnp.float32))               # (rows, rows)
    bias_tiled = jnp.tile(rel_bias_hij.astype(jnp.float32),
                          (1, windows_per_block, windows_per_block))
    bias_mask = jnp.where(diag[None] > 0, bias_tiled, jnp.float32(-1e30))

    # ---- VMEM budget / cost hints -------------------------------------------
    need = _vmem_need(tile_rows, d, heads)
    vmem_limit = int(min(max(2 * need, 32 << 20), vmem_cap - (4 << 20)))

    T = num_windows * n
    flops = (2 * T * d * 3 * d                                   # qkv proj
             + grid_len * heads * 4 * tile_rows * tile_rows * dim_head  # qk^T, attn@v
             + 2 * T * d * d)                                    # out proj
    bytes_accessed = (2 * T * d * 4                              # x in + out (f32)
                      + (3 * d * d + d * d) * 2                  # bf16 weights
                      + heads * tile_rows * tile_rows * 4        # bias mask
                      + 2 * d * 4)                               # LN params

    out = pl.pallas_call(
        _window_attention_kernel,
        out_shape=jax.ShapeDtypeStruct((T, d), x.dtype),
        grid_spec=pltpu.PrefetchScalarGridSpec(
            num_scalar_prefetch=0,
            grid=grid,
            in_specs=[
                pl.BlockSpec((tile_rows, d), lambda i: (i, 0)),            # tokens
                pl.BlockSpec((1, d), lambda i: (0, 0)),                    # gamma
                pl.BlockSpec((1, d), lambda i: (0, 0)),                    # beta
                pl.BlockSpec((d, 3 * d), lambda i: (0, 0)),                # W_qkv (bf16)
                pl.BlockSpec((d, d), lambda i: (0, 0)),                    # W_out (bf16)
                pl.BlockSpec((heads, tile_rows, tile_rows),
                             lambda i: (0, 0, 0)),                         # bias+mask
            ],
            out_specs=pl.BlockSpec((tile_rows, d), lambda i: (i, 0)),
        ),
        compiler_params=pltpu.CompilerParams(
            dimension_semantics=("parallel",),
            vmem_limit_bytes=vmem_limit,
        ),
        cost_estimate=pl.CostEstimate(
            flops=flops,
            transcendentals=grid_len * heads * tile_rows * tile_rows,
            bytes_accessed=bytes_accessed),
    )(x2, gamma2, beta2, w_qkv_b, w_out_b, bias_mask)

    return out.reshape(b, hgt, wid, w1, w2, d)


def make_rel_pos_indices(window_size):
    pos = jnp.arange(window_size)
    gi, gj = jnp.meshgrid(pos, pos, indexing="ij")
    grid = jnp.stack([gi.reshape(-1), gj.reshape(-1)], axis=-1)        # (n, 2)
    rel = grid[:, None, :] - grid[None, :, :] + (window_size - 1)      # (n, n, 2)
    return rel[..., 0] * (2 * window_size - 1) + rel[..., 1]           # (n, n)


def attention_ref(x, gamma, beta, w_qkv, w_out, rel_bias_hij, *, dim_head=32):
    """Pure-JAX reference matching the PyTorch Attention.forward (dropout=0)."""
    hp = jax.lax.Precision.HIGHEST
    b, hgt, wid, w1, w2, d = x.shape
    heads = d // dim_head
    n = w1 * w2
    scale = dim_head ** -0.5
    xt = x.reshape(b * hgt * wid, n, d)
    mu = jnp.mean(xt, axis=-1, keepdims=True)
    var = jnp.mean((xt - mu) ** 2, axis=-1, keepdims=True)
    xn = (xt - mu) * jax.lax.rsqrt(var + 1e-5) * gamma + beta
    qkv = jnp.einsum("bnd,de->bne", xn, w_qkv, precision=hp)
    q, k, v = jnp.split(qkv, 3, axis=-1)
    split = lambda t: t.reshape(b * hgt * wid, n, heads, dim_head).transpose(0, 2, 1, 3)
    q, k, v = split(q) * scale, split(k), split(v)
    sim = jnp.einsum("bhid,bhjd->bhij", q, k, precision=hp) + rel_bias_hij[None]
    sim = sim - jnp.max(sim, axis=-1, keepdims=True)
    p = jnp.exp(sim)
    attn = p / jnp.sum(p, axis=-1, keepdims=True)
    out = jnp.einsum("bhij,bhjd->bhid", attn, v, precision=hp)
    out = out.transpose(0, 2, 1, 3).reshape(b * hgt * wid * n, d)
    out = jnp.einsum("nd,de->ne", out, w_out, precision=hp)
    return out.reshape(b, hgt, wid, w1, w2, d)


if __name__ == "__main__":
    # SMALL shapes consistent with the module's forward:
    #   x: (batch, height, width, window_h, window_w, dim)
    batch, height, width = 2, 2, 2
    window_size = 4             # 16 tokens per window
    dim, dim_head = 64, 32      # 2 heads
    heads = dim // dim_head
    n = window_size * window_size

    key = jax.random.PRNGKey(0)
    kx, kq, ko, kt, kg, kb = jax.random.split(key, 6)

    x = jax.random.normal(
        kx, (batch, height, width, window_size, window_size, dim), jnp.float32)
    w_qkv = jax.random.normal(kq, (dim, 3 * dim), jnp.float32) / jnp.sqrt(dim)
    w_out = jax.random.normal(ko, (dim, dim), jnp.float32) / jnp.sqrt(dim)
    gamma = 1.0 + 0.1 * jax.random.normal(kg, (dim,), jnp.float32)
    beta = 0.1 * jax.random.normal(kb, (dim,), jnp.float32)

    # rel_pos_bias = Embedding((2w-1)^2, heads) gathered by precomputed indices
    rel_table = 0.02 * jax.random.normal(
        kt, ((2 * window_size - 1) ** 2, heads), jnp.float32)
    rel_idx = make_rel_pos_indices(window_size)                 # (n, n)
    rel_bias_hij = rel_table[rel_idx].transpose(2, 0, 1)        # (heads, n, n)

    out = window_attention(x, gamma, beta, w_qkv, w_out, rel_bias_hij,
                           dim_head=dim_head)
    out = jax.block_until_ready(out)

    ref = attention_ref(x, gamma, beta, w_qkv, w_out, rel_bias_hij,
                        dim_head=dim_head)
    assert out.shape == x.shape
    # tolerance covers bf16 matmul operands + approx reciprocal vs f32 reference
    max_diff = float(jnp.max(jnp.abs(out - ref)))
    assert jnp.allclose(out, ref, atol=5e-2, rtol=5e-2), (
        "mismatch vs reference, max abs diff = %f" % max_diff)

    print("KERNEL_OK")
</pallas_src>

<mosaic_0001>
module attributes {stable_mosaic.version = 11 : i64} {
  func.func @_window_attention_kernel(%arg0: i32, %arg1: memref<64x64xf32, #tpu.memory_space<vmem>>, %arg2: memref<1x64xf32, #tpu.memory_space<vmem>>, %arg3: memref<1x64xf32, #tpu.memory_space<vmem>>, %arg4: memref<64x192xbf16, #tpu.memory_space<vmem>>, %arg5: memref<64x64xbf16, #tpu.memory_space<vmem>>, %arg6: memref<2x64x64xf32, #tpu.memory_space<vmem>>, %arg7: memref<64x64xf32, #tpu.memory_space<vmem>>) attributes {dimension_semantics = [#tpu.dimension_semantics<parallel>], iteration_bounds = array<i64: 2>, scalar_prefetch = 0 : i64, scratch_operands = 0 : i64, tpu.core_type = #tpu.core_type<tc>, window_params = [{transform_indices = @transform_0, window_bounds = array<i64: 64, 64>}, {pipeline_mode = #tpu.pipeline_mode<synchronous>, transform_indices = @transform_1, window_bounds = array<i64: 1, 64>}, {pipeline_mode = #tpu.pipeline_mode<synchronous>, transform_indices = @transform_2, window_bounds = array<i64: 1, 64>}, {pipeline_mode = #tpu.pipeline_mode<synchronous>, transform_indices = @transform_3, window_bounds = array<i64: 64, 192>}, {pipeline_mode = #tpu.pipeline_mode<synchronous>, transform_indices = @transform_4, window_bounds = array<i64: 64, 64>}, {pipeline_mode = #tpu.pipeline_mode<synchronous>, transform_indices = @transform_5, window_bounds = array<i64: 2, 64, 64>}, {transform_indices = @transform_6, window_bounds = array<i64: 64, 64>}]} {
    %c0 = arith.constant 0 : index
    %c0_0 = arith.constant 0 : index
    %0 = vector.load %arg1[%c0, %c0_0] : memref<64x64xf32, #tpu.memory_space<vmem>>, vector<64x64xf32>
    %cst = arith.constant dense<0.000000e+00> : vector<64xf32>
    %1 = vector.multi_reduction <add>, %0, %cst [1] : vector<64x64xf32> to vector<64xf32>
    %2 = vector.shape_cast %1 : vector<64xf32> to vector<64x1xf32>
    %cst_1 = arith.constant 6.400000e+01 : f32
    %3 = vector.broadcast %cst_1 : f32 to vector<64x1xf32>
    %4 = arith.divf %2, %3 : vector<64x1xf32>
    %5 = vector.broadcast %4 : vector<64x1xf32> to vector<64x64xf32>
    %6 = arith.subf %0, %5 : vector<64x64xf32>
    %7 = arith.mulf %6, %6 : vector<64x64xf32>
    %cst_2 = arith.constant dense<0.000000e+00> : vector<64xf32>
    %8 = vector.multi_reduction <add>, %7, %cst_2 [1] : vector<64x64xf32> to vector<64xf32>
    %9 = vector.shape_cast %8 : vector<64xf32> to vector<64x1xf32>
    %cst_3 = arith.constant 6.400000e+01 : f32
    %10 = vector.broadcast %cst_3 : f32 to vector<64x1xf32>
    %11 = arith.divf %9, %10 : vector<64x1xf32>
    %cst_4 = arith.constant 9.99999974E-6 : f32
    %12 = vector.broadcast %cst_4 : f32 to vector<64x1xf32>
    %13 = arith.addf %11, %12 : vector<64x1xf32>
    %14 = math.rsqrt %13 : vector<64x1xf32>
    %15 = vector.broadcast %14 : vector<64x1xf32> to vector<64x64xf32>
    %16 = arith.mulf %6, %15 : vector<64x64xf32>
    %c0_5 = arith.constant 0 : index
    %c0_6 = arith.constant 0 : index
    %17 = vector.load %arg2[%c0_5, %c0_6] : memref<1x64xf32, #tpu.memory_space<vmem>>, vector<1x64xf32>
    %18 = vector.broadcast %17 : vector<1x64xf32> to vector<64x64xf32>
    %19 = arith.mulf %16, %18 : vector<64x64xf32>
    %c0_7 = arith.constant 0 : index
    %c0_8 = arith.constant 0 : index
    %20 = vector.load %arg3[%c0_7, %c0_8] : memref<1x64xf32, #tpu.memory_space<vmem>>, vector<1x64xf32>
    %21 = vector.broadcast %20 : vector<1x64xf32> to vector<64x64xf32>
    %22 = arith.addf %19, %21 : vector<64x64xf32>
    %23 = arith.truncf %22 : vector<64x64xf32> to vector<64x64xbf16>
    %c0_9 = arith.constant 0 : index
    %c0_10 = arith.constant 0 : index
    %24 = vector.load %arg4[%c0_9, %c0_10] : memref<64x192xbf16, #tpu.memory_space<vmem>>, vector<64x192xbf16>
    %cst_11 = arith.constant dense<0.000000e+00> : vector<64x192xf32>
    %25 = tpu.matmul %23, %24, %cst_11 {dimension_numbers = #tpu.dot_dimension_numbers<[1], [0], [0], [1], [0, 0, 1, 1], [], []>} : vector<64x64xbf16>, vector<64x192xbf16>, vector<64x192xf32> -> vector<64x192xf32>
    %26 = vector.extract_strided_slice %25 {offsets = [0, 0], sizes = [64, 32], strides = [1, 1]} : vector<64x192xf32> to vector<64x32xf32>
    %cst_12 = arith.constant 0.176776692 : f32
    %27 = vector.broadcast %cst_12 : f32 to vector<64x32xf32>
    %28 = arith.mulf %26, %27 : vector<64x32xf32>
    %29 = arith.truncf %28 : vector<64x32xf32> to vector<64x32xbf16>
    %30 = vector.extract_strided_slice %25 {offsets = [0, 64], sizes = [64, 32], strides = [1, 1]} : vector<64x192xf32> to vector<64x32xf32>
    %31 = arith.truncf %30 : vector<64x32xf32> to vector<64x32xbf16>
    %32 = vector.extract_strided_slice %25 {offsets = [0, 128], sizes = [64, 32], strides = [1, 1]} : vector<64x192xf32> to vector<64x32xf32>
    %33 = arith.truncf %32 : vector<64x32xf32> to vector<64x32xbf16>
    %cst_13 = arith.constant dense<0.000000e+00> : vector<64x64xf32>
    %34 = tpu.matmul %29, %31, %cst_13 {dimension_numbers = #tpu.dot_dimension_numbers<[1], [1], [0], [0], [0, 0, 1, 0], [], []>} : vector<64x32xbf16>, vector<64x32xbf16>, vector<64x64xf32> -> vector<64x64xf32>
    %c0_14 = arith.constant 0 : index
    %c0_15 = arith.constant 0 : index
    %c0_16 = arith.constant 0 : index
    %35 = vector.load %arg6[%c0_14, %c0_15, %c0_16] : memref<2x64x64xf32, #tpu.memory_space<vmem>>, vector<1x64x64xf32>
    %36 = vector.shape_cast %35 : vector<1x64x64xf32> to vector<64x64xf32>
    %37 = arith.addf %34, %36 : vector<64x64xf32>
    %cst_17 = arith.constant dense<0xFF800000> : vector<64xf32>
    %38 = vector.multi_reduction <maximumf>, %37, %cst_17 [1] : vector<64x64xf32> to vector<64xf32>
    %39 = vector.shape_cast %38 : vector<64xf32> to vector<64x1xf32>
    %40 = vector.broadcast %39 : vector<64x1xf32> to vector<64x64xf32>
    %41 = arith.subf %37, %40 : vector<64x64xf32>
    %42 = math.exp %41 : vector<64x64xf32>
    %cst_18 = arith.constant dense<0.000000e+00> : vector<64xf32>
    %43 = vector.multi_reduction <add>, %42, %cst_18 [1] : vector<64x64xf32> to vector<64xf32>
    %44 = vector.shape_cast %43 : vector<64xf32> to vector<64x1xf32>
    %45 = tpu.reciprocal %44 {approx = true} : vector<64x1xf32> -> vector<64x1xf32>
    %46 = vector.broadcast %45 : vector<64x1xf32> to vector<64x64xf32>
    %47 = arith.mulf %42, %46 : vector<64x64xf32>
    %48 = arith.truncf %47 : vector<64x64xf32> to vector<64x64xbf16>
    %cst_19 = arith.constant dense<0.000000e+00> : vector<64x32xf32>
    %49 = tpu.matmul %48, %33, %cst_19 {dimension_numbers = #tpu.dot_dimension_numbers<[1], [0], [0], [1], [0, 0, 1, 1], [], []>} : vector<64x64xbf16>, vector<64x32xbf16>, vector<64x32xf32> -> vector<64x32xf32>
    %50 = vector.extract_strided_slice %25 {offsets = [0, 32], sizes = [64, 32], strides = [1, 1]} : vector<64x192xf32> to vector<64x32xf32>
    %cst_20 = arith.constant 0.176776692 : f32
    %51 = vector.broadcast %cst_20 : f32 to vector<64x32xf32>
    %52 = arith.mulf %50, %51 : vector<64x32xf32>
    %53 = arith.truncf %52 : vector<64x32xf32> to vector<64x32xbf16>
    %54 = vector.extract_strided_slice %25 {offsets = [0, 96], sizes = [64, 32], strides = [1, 1]} : vector<64x192xf32> to vector<64x32xf32>
    %55 = arith.truncf %54 : vector<64x32xf32> to vector<64x32xbf16>
    %56 = vector.extract_strided_slice %25 {offsets = [0, 160], sizes = [64, 32], strides = [1, 1]} : vector<64x192xf32> to vector<64x32xf32>
    %57 = arith.truncf %56 : vector<64x32xf32> to vector<64x32xbf16>
    %cst_21 = arith.constant dense<0.000000e+00> : vector<64x64xf32>
    %58 = tpu.matmul %53, %55, %cst_21 {dimension_numbers = #tpu.dot_dimension_numbers<[1], [1], [0], [0], [0, 0, 1, 0], [], []>} : vector<64x32xbf16>, vector<64x32xbf16>, vector<64x64xf32> -> vector<64x64xf32>
    %c1 = arith.constant 1 : index
    %c0_22 = arith.constant 0 : index
    %c0_23 = arith.constant 0 : index
    %59 = vector.load %arg6[%c1, %c0_22, %c0_23] : memref<2x64x64xf32, #tpu.memory_space<vmem>>, vector<1x64x64xf32>
    %60 = vector.shape_cast %59 : vector<1x64x64xf32> to vector<64x64xf32>
    %61 = arith.addf %58, %60 : vector<64x64xf32>
    %cst_24 = arith.constant dense<0xFF800000> : vector<64xf32>
    %62 = vector.multi_reduction <maximumf>, %61, %cst_24 [1] : vector<64x64xf32> to vector<64xf32>
    %63 = vector.shape_cast %62 : vector<64xf32> to vector<64x1xf32>
    %64 = vector.broadcast %63 : vector<64x1xf32> to vector<64x64xf32>
    %65 = arith.subf %61, %64 : vector<64x64xf32>
    %66 = math.exp %65 : vector<64x64xf32>
    %cst_25 = arith.constant dense<0.000000e+00> : vector<64xf32>
    %67 = vector.multi_reduction <add>, %66, %cst_25 [1] : vector<64x64xf32> to vector<64xf32>
    %68 = vector.shape_cast %67 : vector<64xf32> to vector<64x1xf32>
    %69 = tpu.reciprocal %68 {approx = true} : vector<64x1xf32> -> vector<64x1xf32>
    %70 = vector.broadcast %69 : vector<64x1xf32> to vector<64x64xf32>
    %71 = arith.mulf %66, %70 : vector<64x64xf32>
    %72 = arith.truncf %71 : vector<64x64xf32> to vector<64x64xbf16>
    %cst_26 = arith.constant dense<0.000000e+00> : vector<64x32xf32>
    %73 = tpu.matmul %72, %57, %cst_26 {dimension_numbers = #tpu.dot_dimension_numbers<[1], [0], [0], [1], [0, 0, 1, 1], [], []>} : vector<64x64xbf16>, vector<64x32xbf16>, vector<64x32xf32> -> vector<64x32xf32>
    %74 = tpu.concatenate %49, %73 in 1 : vector<64x32xf32>, vector<64x32xf32> -> vector<64x64xf32>
    %75 = arith.truncf %74 : vector<64x64xf32> to vector<64x64xbf16>
    %c0_27 = arith.constant 0 : index
    %c0_28 = arith.constant 0 : index
    %76 = vector.load %arg5[%c0_27, %c0_28] : memref<64x64xbf16, #tpu.memory_space<vmem>>, vector<64x64xbf16>
    %cst_29 = arith.constant dense<0.000000e+00> : vector<64x64xf32>
    %77 = tpu.matmul %75, %76, %cst_29 {dimension_numbers = #tpu.dot_dimension_numbers<[1], [0], [0], [1], [0, 0, 1, 1], [], []>} : vector<64x64xbf16>, vector<64x64xbf16>, vector<64x64xf32> -> vector<64x64xf32>
    %c0_30 = arith.constant 0 : index
    %c0_31 = arith.constant 0 : index
    %78 = vector.load %arg7[%c0_30, %c0_31] : memref<64x64xf32, #tpu.memory_space<vmem>>, vector<64x64xf32>
    tpu.vector_store %arg7[%c0_30, %c0_31], %77 {strides = array<i32>} : memref<64x64xf32, #tpu.memory_space<vmem>>, vector<64x64xf32>,
    return
  }
  func.func @transform_0(%arg0: i32) -> (i32, i32) {
    %c0_i32 = arith.constant 0 : i32
    %c0_i32_0 = arith.constant 0 : i32
    return %arg0, %c0_i32 : i32, i32
  }
  func.func @transform_1(%arg0: i32) -> (i32, i32) {
    %c0_i32 = arith.constant 0 : i32
    %c0_i32_0 = arith.constant 0 : i32
    %c0_i32_1 = arith.constant 0 : i32
    return %c0_i32, %c0_i32_0 : i32, i32
  }
  func.func @transform_2(%arg0: i32) -> (i32, i32) {
    %c0_i32 = arith.constant 0 : i32
    %c0_i32_0 = arith.constant 0 : i32
    %c0_i32_1 = arith.constant 0 : i32
    return %c0_i32, %c0_i32_0 : i32, i32
  }
  func.func @transform_3(%arg0: i32) -> (i32, i32) {
    %c0_i32 = arith.constant 0 : i32
    %c0_i32_0 = arith.constant 0 : i32
    %c0_i32_1 = arith.constant 0 : i32
    return %c0_i32, %c0_i32_0 : i32, i32
  }
  func.func @transform_4(%arg0: i32) -> (i32, i32) {
    %c0_i32 = arith.constant 0 : i32
    %c0_i32_0 = arith.constant 0 : i32
    %c0_i32_1 = arith.constant 0 : i32
    return %c0_i32, %c0_i32_0 : i32, i32
  }
  func.func @transform_5(%arg0: i32) -> (i32, i32, i32) {
    %c0_i32 = arith.constant 0 : i32
    %c0_i32_0 = arith.constant 0 : i32
    %c0_i32_1 = arith.constant 0 : i32
    %c0_i32_2 = arith.constant 0 : i32
    return %c0_i32, %c0_i32_0, %c0_i32_1 : i32, i32, i32
  }
  func.func @transform_6(%arg0: i32) -> (i32, i32) {
    %c0_i32 = arith.constant 0 : i32
    %c0_i32_0 = arith.constant 0 : i32
    return %arg0, %c0_i32 : i32, i32
  }
}

</mosaic_0001>

<llo_original>
// kernel: tpu_custom_call.1
$region0: #{tpu_custom_call.1}
  #allocation0 [shape = 'u32[]', space=smem, size = 0x4, offset = 0x4, fixed_abs, tag = 'smem constant byte address 0x4 - core index']
  #allocation1 [shape = 'u32[144,128]{1,0:T(1,128)}', space=vmem, size = 0x12000, scoped, tag = 'internal scratch']
  %s0 = inlined_call_operand.vmem [shape: f32[128,64], index: 0, kind: input, shape index: {}]
  %s1 = inlined_call_operand.vmem [shape: f32[1,64], index: 1, kind: input, shape index: {}]
  %s2 = inlined_call_operand.vmem [shape: f32[1,64], index: 2, kind: input, shape index: {}]
  %s3 = inlined_call_operand.vmem [shape: bf16[64,192], index: 3, kind: input, shape index: {}]
  %s4 = inlined_call_operand.hbm [shape: bf16[64,64], index: 4, kind: input, shape index: {}]
  %s5 = inlined_call_operand.vmem [shape: f32[2,64,64], index: 5, kind: input, shape index: {}]
  %s6 = inlined_call_operand.vmem [shape: f32[128,64], index: 6, kind: output, shape index: {}]
  %s7 = sld [smem:[#allocation0]]
  $region61: #{tpu_custom_call.1} parent=0
    _
  %s9 = ssub.s32 1, %s7
  %s10 = scalar_select 0, %s9, %s7
  $region1: #{tpu_custom_call.1} parent=0
    #allocation2 [shape = 'u8[16384]{0}', space=vmem, size = 0x4000, scoped, tag = 'input window, operand 4, single buffered']
    #allocation3 [shape = 's32[2]{0}', space=sflag, size = 0x8, scoped, tag = 'scoped memory for tpu_custom_call.1']
    %11 = vsyncpa [#allocation3], 0
    loop: start=0, step=1, limit=4
    $region2: #{tpu_custom_call.1} parent=1 // loop_pre_header
      _
    $region3: #{tpu_custom_call.1} parent=1 // loop_header
      %s13 = sphi 0, %s17
      %p14 = scmp.ge.s32.totalorder %s13, 4
      %s23 = sphi 0, %s25
      %s26 = sphi 0, %s23
      %s27 = sphi 0, %s26
      %s43 = sphi 0, %s27
      %s47 = sphi 0, %s47
      %s49 = sphi 0, %s47
      %s50 = sphi 0, %s49
      %s64 = sphi 0, %s50
      %s68 = sphi 0, %s68
      %s70 = sphi 0, %s68
      %s71 = sphi 0, %s70
      %s85 = sphi 0, %s71
      %s89 = sphi 0, %s89
      %s91 = sphi 0, %s89
      %s92 = sphi 0, %s91
      %s106 = sphi 0, %s92
      %s110 = sphi 0, %s110
      %s112 = sphi 0, %s110
      %s113 = sphi 0, %s112
      %s127 = sphi 0, %s113
      %s131 = sphi 0, %s131
      %s133 = sphi 0, %s131
      %s134 = sphi 0, %s133
      %s148 = sphi 0, %s134
      %s154 = sphi 0, %s156
      %s157 = sphi 0, %s154
      %s158 = sphi 0, %s157
      %s174 = sphi 0, %s158
    $region4: #{tpu_custom_call.1} parent=1 // loop_header_branch
      %16 = sbr.rel (%p14) target = $region8
    $region5: #{tpu_custom_call.1} parent=1 // loop_body
      %s18 = ssub.s32 %s13, 1
      %s19 = ssub.s32 %s13, 2
      %s20 = sadd.s32 %s13, 1
      %s21 = ssub.s32 %s13, %s20
      %p22 = scmp.eq.s32.totalorder %s21, 0
      %s24 = sadd.s32 %s23, 1
      %s25 = scalar_select %p22, %s23, %s24
      %p28 = pneg %p22
      %p29 = scmp.eq.s32.totalorder %s13, 1
      %p30 = por %p28, %p29
      %p31 = scmp.ne.s32.totalorder %s23, %s26
      %p32 = scmp.eq.s32.totalorder %s13, 0
      %p33 = por %p31, %p32
      %p34 = scmp.ne.s32.totalorder %s23, %s26
      %p35 = scmp.eq.s32.totalorder %s18, 1
      %p36 = por %p34, %p35
      %p37 = scmp.ne.s32.totalorder %s26, %s27
      %p38 = scmp.eq.s32.totalorder %s18, 0
      %p39 = por %p37, %p38
      %p40 = scmp.ne.s32.totalorder %s26, %s27
      %p41 = scmp.eq.s32.totalorder %s19, 1
      %p42 = por %p40, %p41
      %p44 = scmp.ne.s32.totalorder %s27, %s43
      %p45 = scmp.eq.s32.totalorder %s19, 0
      %p46 = por %p44, %p45
      %s48 = sadd.s32 %s47, 1
      %p51 = scmp.eq.s32.totalorder %s13, 1
      %p52 = scmp.ne.s32.totalorder %s47, %s49
      %p53 = scmp.eq.s32.totalorder %s13, 0
      %p54 = por %p52, %p53
      %p55 = scmp.ne.s32.totalorder %s47, %s49
      %p56 = scmp.eq.s32.totalorder %s18, 1
      %p57 = por %p55, %p56
      %p58 = scmp.ne.s32.totalorder %s49, %s50
      %p59 = scmp.eq.s32.totalorder %s18, 0
      %p60 = por %p58, %p59
      %p61 = scmp.ne.s32.totalorder %s49, %s50
      %p62 = scmp.eq.s32.totalorder %s19, 1
      %p63 = por %p61, %p62
      %p65 = scmp.ne.s32.totalorder %s50, %s64
      %p66 = scmp.eq.s32.totalorder %s19, 0
      %p67 = por %p65, %p66
      %s69 = sadd.s32 %s68, 1
      %p72 = scmp.eq.s32.totalorder %s13, 1
      %p73 = scmp.ne.s32.totalorder %s68, %s70
      %p74 = scmp.eq.s32.totalorder %s13, 0
      %p75 = por %p73, %p74
      %p76 = scmp.ne.s32.totalorder %s68, %s70
      %p77 = scmp.eq.s32.totalorder %s18, 1
      %p78 = por %p76, %p77
      %p79 = scmp.ne.s32.totalorder %s70, %s71
      %p80 = scmp.eq.s32.totalorder %s18, 0
      %p81 = por %p79, %p80
      %p82 = scmp.ne.s32.totalorder %s70, %s71
      %p83 = scmp.eq.s32.totalorder %s19, 1
      %p84 = por %p82, %p83
      %p86 = scmp.ne.s32.totalorder %s71, %s85
      %p87 = scmp.eq.s32.totalorder %s19, 0
      %p88 = por %p86, %p87
      %s90 = sadd.s32 %s89, 1
      %p93 = scmp.eq.s32.totalorder %s13, 1
      %p94 = scmp.ne.s32.totalorder %s89, %s91
      %p95 = scmp.eq.s32.totalorder %s13, 0
      %p96 = por %p94, %p95
      %p97 = scmp.ne.s32.totalorder %s89, %s91
      %p98 = scmp.eq.s32.totalorder %s18, 1
      %p99 = por %p97, %p98
      %p100 = scmp.ne.s32.totalorder %s91, %s92
      %p101 = scmp.eq.s32.totalorder %s18, 0
      %p102 = por %p100, %p101
      %p103 = scmp.ne.s32.totalorder %s91, %s92
      %p104 = scmp.eq.s32.totalorder %s19, 1
      %p105 = por %p103, %p104
      %p107 = scmp.ne.s32.totalorder %s92, %s106
      %p108 = scmp.eq.s32.totalorder %s19, 0
      %p109 = por %p107, %p108
      %s111 = sadd.s32 %s110, 1
      %p114 = scmp.eq.s32.totalorder %s13, 1
      %p115 = scmp.ne.s32.totalorder %s110, %s112
      %p116 = scmp.eq.s32.totalorder %s13, 0
      %p117 = por %p115, %p116
      %p118 = scmp.ne.s32.totalorder %s110, %s112
      %p119 = scmp.eq.s32.totalorder %s18, 1
      %p120 = por %p118, %p119
      %p121 = scmp.ne.s32.totalorder %s112, %s113
      %p122 = scmp.eq.s32.totalorder %s18, 0
      %p123 = por %p121, %p122
      %p124 = scmp.ne.s32.totalorder %s112, %s113
      %p125 = scmp.eq.s32.totalorder %s19, 1
      %p126 = por %p124, %p125
      %p128 = scmp.ne.s32.totalorder %s113, %s127
      %p129 = scmp.eq.s32.totalorder %s19, 0
      %p130 = por %p128, %p129
      %s132 = sadd.s32 %s131, 1
      %p135 = scmp.eq.s32.totalorder %s13, 1
      %p136 = scmp.ne.s32.totalorder %s131, %s133
      %p137 = scmp.eq.s32.totalorder %s13, 0
      %p138 = por %p136, %p137
      %p139 = scmp.ne.s32.totalorder %s131, %s133
      %p140 = scmp.eq.s32.totalorder %s18, 1
      %p141 = por %p139, %p140
      %p142 = scmp.ne.s32.totalorder %s133, %s134
      %p143 = scmp.eq.s32.totalorder %s18, 0
      %p144 = por %p142, %p143
      %p145 = scmp.ne.s32.totalorder %s133, %s134
      %p146 = scmp.eq.s32.totalorder %s19, 1
      %p147 = por %p145, %p146
      %p149 = scmp.ne.s32.totalorder %s134, %s148
      %p150 = scmp.eq.s32.totalorder %s19, 0
      %p151 = por %p149, %p150
      %s152 = ssub.s32 %s13, %s20
      %p153 = scmp.eq.s32.totalorder %s152, 0
      %s155 = sadd.s32 %s154, 1
      %s156 = scalar_select %p153, %s154, %s155
      %p159 = pneg %p153
      %p160 = scmp.eq.s32.totalorder %s13, 1
      %p161 = por %p159, %p160
      %p162 = scmp.ne.s32.totalorder %s154, %s157
      %p163 = scmp.eq.s32.totalorder %s13, 0
      %p164 = por %p162, %p163
      %p165 = scmp.ne.s32.totalorder %s154, %s157
      %p166 = scmp.eq.s32.totalorder %s18, 1
      %p167 = por %p165, %p166
      %p168 = scmp.ne.s32.totalorder %s157, %s158
      %p169 = scmp.eq.s32.totalorder %s18, 0
      %p170 = por %p168, %p169
      %p171 = scmp.ne.s32.totalorder %s157, %s158
      %p172 = scmp.eq.s32.totalorder %s19, 1
      %p173 = por %p171, %p172
      %p175 = scmp.ne.s32.totalorder %s158, %s174
      %p176 = scmp.eq.s32.totalorder %s19, 0
      %p177 = por %p175, %p176
      %p178 = scmp.le.s32.totalorder 1, %s13
      %p179 = scmp.lt.s32.totalorder %s13, 3
      %p180 = pnand %p178, %p179
      %p181 = pneg %p180
      // Predicated region
      $region9: #{tpu_custom_call.1} parent=5 // pred_check
        _
      $region10: #{tpu_custom_call.1} parent=5 // pred_check_branch
        %183 = sbr.rel (%p180) target = $region12
      $region11: #{tpu_custom_call.1} parent=5 // pred_region
        %s184 = ssub.s32 %s13, 1
        // Predicated region
        $region13: #{tpu_custom_call.1} parent=11 // pred_check
          %p185 = pneg %p60
        $region14: #{tpu_custom_call.1} parent=11 // pred_check_branch
          %187 = sbr.rel (%p185) target = $region16
        $region15: #{tpu_custom_call.1} parent=11 // pred_region
          _
        $region16: #{tpu_custom_call.1} parent=11 // pred_fallthru
          _
        // Predicated region
        $region17: #{tpu_custom_call.1} parent=11 // pred_check
          %p188 = pneg %p81
        $region18: #{tpu_custom_call.1} parent=11 // pred_check_branch
          %190 = sbr.rel (%p188) target = $region20
        $region19: #{tpu_custom_call.1} parent=11 // pred_region
          _
        $region20: #{tpu_custom_call.1} parent=11 // pred_fallthru
          _
        // Predicated region
        $region21: #{tpu_custom_call.1} parent=11 // pred_check
          %p191 = pneg %p102
        $region22: #{tpu_custom_call.1} parent=11 // pred_check_branch
          %193 = sbr.rel (%p191) target = $region24
        $region23: #{tpu_custom_call.1} parent=11 // pred_region
          _
        $region24: #{tpu_custom_call.1} parent=11 // pred_fallthru
          _
        // Predicated region
        $region25: #{tpu_custom_call.1} parent=11 // pred_check
          %p194 = pneg %p123
        $region26: #{tpu_custom_call.1} parent=11 // pred_check_branch
          %196 = sbr.rel (%p194) target = $region28
        $region27: #{tpu_custom_call.1} parent=11 // pred_region
          %s198 = ssub.s32 512, 512
          %199 = vsyncadd [#allocation3], %s198
          %s200 = sshll.u32 [#allocation2], 4
          %s201 = int_to_ptr.vmem [resolvable:$true] %s200
          %206 = dma.hbm_to_vmem [thread:$0]  %s4, 512, %s201, [#allocation3], 64, 64, 4
        $region28: #{tpu_custom_call.1} parent=11 // pred_fallthru
          _
        // Predicated region
        $region29: #{tpu_custom_call.1} parent=11 // pred_check
          %p207 = pneg %p144
        $region30: #{tpu_custom_call.1} parent=11 // pred_check_branch
          %209 = sbr.rel (%p207) target = $region32
        $region31: #{tpu_custom_call.1} parent=11 // pred_region
          _
        $region32: #{tpu_custom_call.1} parent=11 // pred_fallthru
          _
      $region12: #{tpu_custom_call.1} parent=5 // pred_fallthru
        _
      %p210 = scmp.lt.s32.totalorder %s13, 2
      // Predicated region
      $region33: #{tpu_custom_call.1} parent=5 // pred_check
        %p211 = pneg %p210
      $region34: #{tpu_custom_call.1} parent=5 // pred_check_branch
        %213 = sbr.rel (%p211) target = $region36
      $region35: #{tpu_custom_call.1} parent=5 // pred_region
        // Predicated region
        $region37: #{tpu_custom_call.1} parent=35 // pred_check
          %p214 = pneg %p33
        $region38: #{tpu_custom_call.1} parent=35 // pred_check_branch
          %216 = sbr.rel (%p214) target = $region40
        $region39: #{tpu_custom_call.1} parent=35 // pred_region
          %s217 = smul.u32 8, %s13
          %p218 = scmp.lt.s32.totalorder %s217, 15
          %s219 = scalar_select %p218, %s217, 15
          %s220 = smul.addr %s219, 8
          %s221 = scalar_lea.vmem %s0, %s220
          %s222 = smul.u32 8, %s13
        $region40: #{tpu_custom_call.1} parent=35 // pred_fallthru
          _
      $region36: #{tpu_custom_call.1} parent=5 // pred_fallthru
        _
      %p223 = scmp.le.s32.totalorder 1, %s13
      %p224 = scmp.lt.s32.totalorder %s13, 3
      %p225 = pnand %p223, %p224
      %p226 = pneg %p225
      // Predicated region
      $region41: #{tpu_custom_call.1} parent=5 // pred_check
        _
      $region42: #{tpu_custom_call.1} parent=5 // pred_check_branch
        %228 = sbr.rel (%p225) target = $region44
      $region43: #{tpu_custom_call.1} parent=5 // pred_region
        %s229 = ssub.s32 %s13, 1
        // Predicated region
        $region45: #{tpu_custom_call.1} parent=43 // pred_check
          %p230 = pneg %p123
        $region46: #{tpu_custom_call.1} parent=43 // pred_check_branch
          %232 = sbr.rel (%p230) target = $region48
        $region47: #{tpu_custom_call.1} parent=43 // pred_region
          %233 = dma.done [#allocation3], 512
        $region48: #{tpu_custom_call.1} parent=43 // pred_fallthru
          _
        %s234 = smul.u32 8, %s18
        %p235 = scmp.lt.s32.totalorder %s234, 15
        %s236 = scalar_select %p235, %s234, 15
        %s237 = smul.addr %s236, 8
        %s238 = scalar_lea.vmem %s0, %s237
        %p239 = pneg %p39
        %p240 = pneg %p36
        %p241 = pneg %p60
        %p242 = pneg %p57
        %p243 = pneg %p81
        %p244 = pneg %p78
        %p245 = pneg %p102
        %p246 = pneg %p99
        %p247 = pneg %p123
        %p248 = pneg %p120
        %p249 = pneg %p144
        %p250 = pneg %p141
        %p251 = pneg %p170
        %p252 = pneg %p167
        %s253 = smul.u32 8, %s18
        %p254 = scmp.lt.s32.totalorder %s253, 15
        %s255 = scalar_select %p254, %s253, 15
        %s256 = smul.addr %s255, 8
        %s257 = scalar_lea.vmem %s6, %s256
        %s258 = smul.u32 8, %s18
        %p259 = scmp.lt.s32.totalorder %s258, 15
        %s260 = scalar_select %p259, %s258, 15
        %s261 = smul.addr %s260, 8
        %s262 = scalar_lea.vmem %s0, %s261
        %s263 = smul.u32 8, %s18
        %s264 = smul.u32 8, %s18
        %p265 = scmp.lt.s32.totalorder %s264, 15
        %s266 = scalar_select %p265, %s264, 15
        %s267 = smul.addr %s266, 8
        %s268 = scalar_lea.vmem %s6, %s267
        %s269 = smul.u32 8, %s18
        %v271 = vld [vmem:[%s262] sm:$0xff]
        %v272 = vld [vmem:[%s262 + $0x8] sm:$0xff]
        %v273 = vld [vmem:[%s262 + $0x10] sm:$0xff]
        %v274 = vld [vmem:[%s262 + $0x18] sm:$0xff]
        %v275 = vld [vmem:[%s262 + $0x20] sm:$0xff]
        %v276 = vld [vmem:[%s262 + $0x28] sm:$0xff]
        %v277 = vld [vmem:[%s262 + $0x30] sm:$0xff]
        %v278 = vld [vmem:[%s262 + $0x38] sm:$0xff]
        %vm279 = vcmask 523264
        %v280 = vsel %vm279, %v271, 0.0
        %281 = vadd.xlane.f32.xlu0 %v280
        %v282 = vpop.xlane.xlu0 %281
        %v283 = vsel %vm279, %v272, 0.0
        %284 = vadd.xlane.f32.xlu0 %v283
        %v285 = vpop.xlane.xlu0 %284
        %v286 = vsel %vm279, %v273, 0.0
        %287 = vadd.xlane.f32.xlu0 %v286
        %v288 = vpop.xlane.xlu0 %287
        %v289 = vsel %vm279, %v274, 0.0
        %290 = vadd.xlane.f32.xlu0 %v289
        %v291 = vpop.xlane.xlu0 %290
        %v292 = vsel %vm279, %v275, 0.0
        %293 = vadd.xlane.f32.xlu0 %v292
        %v294 = vpop.xlane.xlu0 %293
        %v295 = vsel %vm279, %v276, 0.0
        %296 = vadd.xlane.f32.xlu0 %v295
        %v297 = vpop.xlane.xlu0 %296
        %v298 = vsel %vm279, %v277, 0.0
        %299 = vadd.xlane.f32.xlu0 %v298
        %v300 = vpop.xlane.xlu0 %299
        %v301 = vsel %vm279, %v278, 0.0
        %302 = vadd.xlane.f32.xlu0 %v301
        %v303 = vpop.xlane.xlu0 %302
        %v304 = vrcp.pop 64.0
        %v305 = vmul.f32 %v282, %v304
        %v306 = vmul.f32 %v285, %v304
        %v307 = vmul.f32 %v288, %v304
        %v308 = vmul.f32 %v291, %v304
        %v309 = vmul.f32 %v294, %v304
        %v310 = vmul.f32 %v297, %v304
        %v311 = vmul.f32 %v300, %v304
        %v312 = vmul.f32 %v303, %v304
        %v313 = vsub.f32 %v271, %v305
        %v314 = vsub.f32 %v272, %v306
        %v315 = vsub.f32 %v273, %v307
        %v316 = vsub.f32 %v274, %v308
        %v317 = vsub.f32 %v275, %v309
        %v318 = vsub.f32 %v276, %v310
        %v319 = vsub.f32 %v277, %v311
        %v320 = vsub.f32 %v278, %v312
        %v321 = vmul.f32 %v313, %v313
        %v322 = vmul.f32 %v314, %v314
        %v323 = vmul.f32 %v315, %v315
        %v324 = vmul.f32 %v316, %v316
        %v325 = vmul.f32 %v317, %v317
        %v326 = vmul.f32 %v318, %v318
        %v327 = vmul.f32 %v319, %v319
        %v328 = vmul.f32 %v320, %v320
        %v329 = vsel %vm279, %v321, 0.0
        %330 = vadd.xlane.f32.xlu0 %v329
        %v331 = vpop.xlane.xlu0 %330
        %v332 = vsel %vm279, %v322, 0.0
        %333 = vadd.xlane.f32.xlu0 %v332
        %v334 = vpop.xlane.xlu0 %333
        %v335 = vsel %vm279, %v323, 0.0
        %336 = vadd.xlane.f32.xlu0 %v335
        %v337 = vpop.xlane.xlu0 %336
        %v338 = vsel %vm279, %v324, 0.0
        %339 = vadd.xlane.f32.xlu0 %v338
        %v340 = vpop.xlane.xlu0 %339
        %v341 = vsel %vm279, %v325, 0.0
        %342 = vadd.xlane.f32.xlu0 %v341
        %v343 = vpop.xlane.xlu0 %342
        %v344 = vsel %vm279, %v326, 0.0
        %345 = vadd.xlane.f32.xlu0 %v344
        %v346 = vpop.xlane.xlu0 %345
        %v347 = vsel %vm279, %v327, 0.0
        %348 = vadd.xlane.f32.xlu0 %v347
        %v349 = vpop.xlane.xlu0 %348
        %v350 = vsel %vm279, %v328, 0.0
        %351 = vadd.xlane.f32.xlu0 %v350
        %v352 = vpop.xlane.xlu0 %351
        %v353 = vmul.f32 %v331, %v304
        %v354 = vmul.f32 %v334, %v304
        %v355 = vmul.f32 %v337, %v304
        %v356 = vmul.f32 %v340, %v304
        %v357 = vmul.f32 %v343, %v304
        %v358 = vmul.f32 %v346, %v304
        %v359 = vmul.f32 %v349, %v304
        %v360 = vmul.f32 %v352, %v304
        %v361 = vadd.f32 %v353, 1e-05
        %v362 = vadd.f32 %v354, 1e-05
        %v363 = vadd.f32 %v355, 1e-05
        %v364 = vadd.f32 %v356, 1e-05
        %v365 = vadd.f32 %v357, 1e-05
        %v366 = vadd.f32 %v358, 1e-05
        %v367 = vadd.f32 %v359, 1e-05
        %v368 = vadd.f32 %v360, 1e-05
        %v369 = vrsqrt.pop %v361
        %v370 = vrsqrt.pop %v362
        %v371 = vrsqrt.pop %v363
        %v372 = vrsqrt.pop %v364
        %v373 = vrsqrt.pop %v365
        %v374 = vrsqrt.pop %v366
        %v375 = vrsqrt.pop %v367
        %v376 = vrsqrt.pop %v368
        %v377 = vmul.f32 %v313, %v369
        %v378 = vmul.f32 %v314, %v370
        %v379 = vmul.f32 %v315, %v371
        %v380 = vmul.f32 %v316, %v372
        %v381 = vmul.f32 %v317, %v373
        %v382 = vmul.f32 %v318, %v374
        %v383 = vmul.f32 %v319, %v375
        %v384 = vmul.f32 %v320, %v376
        %v385 = vld [vmem:[%s1] sm:$0x1]
        %v387 = vlaneseq
        %v388 = vshrl.u32 %v387, 7
        %v389 = vsub.s32 0, %v388
        %v390 = vrot.slane %v385, %v389
        %v392 = vmul.f32 %v377, %v390
        %v393 = vmul.f32 %v378, %v390
        %v394 = vmul.f32 %v379, %v390
        %v395 = vmul.f32 %v380, %v390
        %v396 = vmul.f32 %v381, %v390
        %v397 = vmul.f32 %v382, %v390
        %v398 = vmul.f32 %v383, %v390
        %v399 = vmul.f32 %v384, %v390
        %v400 = vld [vmem:[%s2] sm:$0x1]
        %v402 = vlaneseq
        %v403 = vshrl.u32 %v402, 7
        %v404 = vsub.s32 0, %v403
        %v405 = vrot.slane %v400, %v404
        %v407 = vadd.f32 %v392, %v405
        %v408 = vadd.f32 %v393, %v405
        %v409 = vadd.f32 %v394, %v405
        %v410 = vadd.f32 %v395, %v405
        %v411 = vadd.f32 %v396, %v405
        %v412 = vadd.f32 %v397, %v405
        %v413 = vadd.f32 %v398, %v405
        %v414 = vadd.f32 %v399, %v405
        %v415 = vpack.c.bf16 %v408, %v407
        %v416 = vpack.c.bf16 %v410, %v409
        %v417 = vpack.c.bf16 %v412, %v411
        %v418 = vpack.c.bf16 %v414, %v413
        %v419 = vld [vmem:[%s3] sm:$0xff]
        %v420 = vld [vmem:[%s3 + $0x8] sm:$0xff]
        %v421 = vld [vmem:[%s3 + $0x10] sm:$0xff]
        %v422 = vld [vmem:[%s3 + $0x18] sm:$0xff]
        %v423 = vld [vmem:[%s3 + $0x20] sm:$0xff]
        %v424 = vld [vmem:[%s3 + $0x28] sm:$0xff]
        %v425 = vld [vmem:[%s3 + $0x30] sm:$0xff]
        %v426 = vld [vmem:[%s3 + $0x38] sm:$0xff]
        %v435 = vunpack.c.l.b16 %v419
        %v436 = vunpack.c.h.b16 %v419
        %v437 = vunpack.c.l.b16 %v420
        %v438 = vunpack.c.h.b16 %v420
        %v439 = vunpack.c.l.b16 %v421
        %v440 = vunpack.c.h.b16 %v421
        %v441 = vunpack.c.l.b16 %v422
        %v442 = vunpack.c.h.b16 %v422
        %v443 = vunpack.c.l.b16 %v423
        %v444 = vunpack.c.h.b16 %v423
        %v445 = vunpack.c.l.b16 %v424
        %v446 = vunpack.c.h.b16 %v424
        %v447 = vunpack.c.l.b16 %v425
        %v448 = vunpack.c.h.b16 %v425
        %v449 = vunpack.c.l.b16 %v426
        %v450 = vunpack.c.h.b16 %v426
        %v451 = vpack.c.b16 %v437, %v435
        %v452 = vpack.c.b16 %v438, %v436
        %v453 = vpack.c.b16 %v441, %v439
        %v454 = vpack.c.b16 %v442, %v440
        %v455 = vpack.c.b16 %v445, %v443
        %v456 = vpack.c.b16 %v446, %v444
        %v457 = vpack.c.b16 %v449, %v447
        %v458 = vpack.c.b16 %v450, %v448
        %v468 = vsel %vm279, %v415, 0
        %v471 = vsel %vm279, %v416, 0
        %v474 = vsel %vm279, %v417, 0
        %v477 = vsel %vm279, %v418, 0
        %479 = vmatprep.subr.bf16.mxu0 %v452
        %480 = vmatpush1.bf16.msra.mxu0 %v451
        %481 = vmatprep.subr.bf16.mxu0 %v454
        %482 = vmatpush1.bf16.msra.mxu0 %v453
        %483 = vmatprep.subr.bf16.mxu0 %v456
        %484 = vmatpush1.bf16.msra.mxu0 %v455
        %485 = vmatprep.subr.bf16.mxu0 %v458
        %486 = vmatpush1.bf16.msra.mxu0 %v457
        %487 = vmatprep.subr.bf16.mxu0 0
        %488 = vmatpush1.bf16.msra.mxu0 0
        %489 = vmatprep.subr.bf16.mxu0 0
        %490 = vmatpush1.bf16.msra.mxu0 0
        %491 = vmatprep.subr.bf16.mxu0 0
        %492 = vmatpush1.bf16.msra.mxu0 0
        %493 = vmatprep.subr.bf16.mxu0 0
        %494 = vmatpush1.bf16.msra.mxu0 0
        %495 = vmatprep.subr.bf16.mxu0 0
        %496 = vmatpush1.bf16.msra.mxu0 0
        %497 = vmatprep.subr.bf16.mxu0 0
        %498 = vmatpush1.bf16.msra.mxu0 0
        %499 = vmatprep.subr.bf16.mxu0 0
        %500 = vmatpush1.bf16.msra.mxu0 0
        %501 = vmatprep.subr.bf16.mxu0 0
        %502 = vmatpush1.bf16.msra.mxu0 0
        %503 = vmatprep.subr.bf16.mxu0 0
        %504 = vmatpush1.bf16.msra.mxu0 0
        %505 = vmatprep.subr.bf16.mxu0 0
        %506 = vmatpush1.bf16.msra.mxu0 0
        %507 = vmatprep.subr.bf16.mxu0 0
        %508 = vmatpush1.bf16.msra.mxu0 0
        %509 = vmatprep.subr.bf16.mxu0 0
        %510 = vmatpush1.bf16.msra.mxu0 0
        %511 = vmatprep.mubr.bf16.mxu0 0
        %512 = vmatmul.mubr.bf16.gmra.mrb[0].mxu0 %v468
        %v513 = vpop.f32.mrb[0].mxu0
        %v514 = vadd.f32 0.0, %v513
        %v515 = vpop.f32.mrb[0].mxu0
        %v516 = vadd.f32 0.0, %v515
        %v517 = vpop.f32.mrb[0].mxu0
        %v518 = vadd.f32 0.0, %v517
        %v519 = vpop.f32.mrb[0].mxu0
        %v520 = vadd.f32 0.0, %v519
        %521 = vmatprep.mubr.bf16.mxu0 0
        %522 = vmatmul.mubr.bf16.gmra.mrb[0].mxu0 %v471
        %v523 = vpop.f32.mrb[0].mxu0
        %v524 = vadd.f32 0.0, %v523
        %v525 = vpop.f32.mrb[0].mxu0
        %v526 = vadd.f32 0.0, %v525
        %v527 = vpop.f32.mrb[0].mxu0
        %v528 = vadd.f32 0.0, %v527
        %v529 = vpop.f32.mrb[0].mxu0
        %v530 = vadd.f32 0.0, %v529
        %531 = vmatprep.mubr.bf16.mxu0 0
        %532 = vmatmul.mubr.bf16.gmra.mrb[0].mxu0 %v474
        %v533 = vpop.f32.mrb[0].mxu0
        %v534 = vadd.f32 0.0, %v533
        %v535 = vpop.f32.mrb[0].mxu0
        %v536 = vadd.f32 0.0, %v535
        %v537 = vpop.f32.mrb[0].mxu0
        %v538 = vadd.f32 0.0, %v537
        %v539 = vpop.f32.mrb[0].mxu0
        %v540 = vadd.f32 0.0, %v539
        %541 = vmatprep.mubr.bf16.mxu0 0
        %542 = vmatmul.mubr.bf16.gmra.mrb[0].mxu0 %v477
        %v543 = vpop.f32.mrb[0].mxu0
        %v544 = vadd.f32 0.0, %v543
        %v545 = vpop.f32.mrb[0].mxu0
        %v546 = vadd.f32 0.0, %v545
        %v547 = vpop.f32.mrb[0].mxu0
        %v548 = vadd.f32 0.0, %v547
        %v549 = vpop.f32.mrb[0].mxu0
        %v550 = vadd.f32 0.0, %v549
        %551 = vdwg.mxu0
        %v552 = vmul.f32 %v514, 0.17677669
        %v553 = vmul.f32 %v518, 0.17677669
        %v554 = vmul.f32 %v524, 0.17677669
        %v555 = vmul.f32 %v528, 0.17677669
        %v556 = vmul.f32 %v534, 0.17677669
        %v557 = vmul.f32 %v538, 0.17677669
        %v558 = vmul.f32 %v544, 0.17677669
        %v559 = vmul.f32 %v548, 0.17677669
        %v560 = vpack.c.bf16 %v553, %v552
        %v561 = vpack.c.bf16 %v555, %v554
        %v562 = vpack.c.bf16 %v557, %v556
        %v563 = vpack.c.bf16 %v559, %v558
        %v564 = vpack.c.bf16 %v518, %v514
        %v565 = vpack.c.bf16 %v528, %v524
        %v566 = vpack.c.bf16 %v538, %v534
        %v567 = vpack.c.bf16 %v548, %v544
        %v568 = vpack.c.bf16 %v520, %v516
        %v569 = vpack.c.bf16 %v530, %v526
        %v570 = vpack.c.bf16 %v540, %v536
        %v571 = vpack.c.bf16 %v550, %v546
        %v572 = vld [vmem:[%s5] sm:$0xff]
        %v573 = vld [vmem:[%s5 + $0x8] sm:$0xff]
        %v574 = vld [vmem:[%s5 + $0x10] sm:$0xff]
        %v575 = vld [vmem:[%s5 + $0x18] sm:$0xff]
        %v576 = vld [vmem:[%s5 + $0x20] sm:$0xff]
        %v577 = vld [vmem:[%s5 + $0x28] sm:$0xff]
        %v578 = vld [vmem:[%s5 + $0x30] sm:$0xff]
        %v579 = vld [vmem:[%s5 + $0x38] sm:$0xff]
        %584 = vrot.lane.b32.xlu0 %v564, 64
        %v585 = vpop.permute.xlu0 %584
        %586 = vrot.lane.b32.xlu0 %v565, 64
        %v587 = vpop.permute.xlu0 %586
        %588 = vrot.lane.b32.xlu0 %v566, 64
        %v589 = vpop.permute.xlu0 %588
        %590 = vrot.lane.b32.xlu0 %v567, 64
        %v591 = vpop.permute.xlu0 %590
        %vm592 = vcmask 261120
        %v594 = vsel %vm592, %v560, 0
        %v597 = vsel %vm592, %v561, 0
        %v600 = vsel %vm592, %v562, 0
        %v603 = vsel %vm592, %v563, 0
        %v606 = vsel %vm592, %v585, 0
        %v609 = vsel %vm592, %v587, 0
        %v612 = vsel %vm592, %v589, 0
        %v615 = vsel %vm592, %v591, 0
        %617 = vmatprep.subr.bf16.mxu0 0
        %618 = vmatpush1.bf16.xpose.msra.mxu0 %v606
        %619 = vmatprep.subr.bf16.mxu0 0
        %620 = vmatpush1.bf16.xpose.msra.mxu0 %v609
        %621 = vmatprep.subr.bf16.mxu0 0
        %622 = vmatpush1.bf16.xpose.msra.mxu0 %v612
        %623 = vmatprep.subr.bf16.mxu0 0
        %624 = vmatpush1.bf16.xpose.msra.mxu0 %v615
        %625 = vmatprep.subr.bf16.mxu0 0
        %626 = vmatpush1.bf16.xpose.msra.mxu0 0
        %627 = vmatprep.subr.bf16.mxu0 0
        %628 = vmatpush1.bf16.xpose.msra.mxu0 0
        %629 = vmatprep.subr.bf16.mxu0 0
        %630 = vmatpush1.bf16.xpose.msra.mxu0 0
        %631 = vmatprep.subr.bf16.mxu0 0
        %632 = vmatpush1.bf16.xpose.msra.mxu0 0
        %633 = vmatprep.subr.bf16.mxu0 0
        %634 = vmatpush1.bf16.xpose.msra.mxu0 0
        %635 = vmatprep.subr.bf16.mxu0 0
        %636 = vmatpush1.bf16.xpose.msra.mxu0 0
        %637 = vmatprep.subr.bf16.mxu0 0
        %638 = vmatpush1.bf16.xpose.msra.mxu0 0
        %639 = vmatprep.subr.bf16.mxu0 0
        %640 = vmatpush1.bf16.xpose.msra.mxu0 0
        %641 = vmatprep.subr.bf16.mxu0 0
        %642 = vmatpush1.bf16.xpose.msra.mxu0 0
        %643 = vmatprep.subr.bf16.mxu0 0
        %644 = vmatpush1.bf16.xpose.msra.mxu0 0
        %645 = vmatprep.subr.bf16.mxu0 0
        %646 = vmatpush1.bf16.xpose.msra.mxu0 0
        %647 = vmatprep.subr.bf16.mxu0 0
        %648 = vmatpush1.bf16.xpose.msra.mxu0 0
        %649 = vmatprep.mubr.bf16.mxu0 0
        %650 = vmatmul.mubr.bf16.gmra.mrb[0].mxu0 %v594
        %v651 = vpop.f32.mrb[0].mxu0
        %v652 = vadd.f32 %v572, %v651
        %v653 = vpop.f32.mrb[0].mxu0
        %v654 = vpop.f32.mrb[0].mxu0
        %v655 = vadd.f32 %v573, %v654
        %v656 = vpop.f32.mrb[0].mxu0
        %657 = vmatprep.mubr.bf16.mxu0 0
        %658 = vmatmul.mubr.bf16.gmra.mrb[0].mxu0 %v597
        %v659 = vpop.f32.mrb[0].mxu0
        %v660 = vadd.f32 %v574, %v659
        %v661 = vpop.f32.mrb[0].mxu0
        %v662 = vpop.f32.mrb[0].mxu0
        %v663 = vadd.f32 %v575, %v662
        %v664 = vpop.f32.mrb[0].mxu0
        %665 = vmatprep.mubr.bf16.mxu0 0
        %666 = vmatmul.mubr.bf16.gmra.mrb[0].mxu0 %v600
        %v667 = vpop.f32.mrb[0].mxu0
        %v668 = vadd.f32 %v576, %v667
        %v669 = vpop.f32.mrb[0].mxu0
        %v670 = vpop.f32.mrb[0].mxu0
        %v671 = vadd.f32 %v577, %v670
        %v672 = vpop.f32.mrb[0].mxu0
        %673 = vmatprep.mubr.bf16.mxu0 0
        %674 = vmatmul.mubr.bf16.gmra.mrb[0].mxu0 %v603
        %v675 = vpop.f32.mrb[0].mxu0
        %v676 = vadd.f32 %v578, %v675
        %v677 = vpop.f32.mrb[0].mxu0
        %v678 = vpop.f32.mrb[0].mxu0
        %v679 = vadd.f32 %v579, %v678
        %v680 = vpop.f32.mrb[0].mxu0
        %681 = vdwg.mxu0
        %v682 = vsel %vm279, %v652, -inf
        %683 = vmax.xlane.f32.xlu0 %v682
        %v684 = vpop.xlane.xlu0 %683
        %v685 = vsel %vm279, %v655, -inf
        %686 = vmax.xlane.f32.xlu0 %v685
        %v687 = vpop.xlane.xlu0 %686
        %v688 = vsel %vm279, %v660, -inf
        %689 = vmax.xlane.f32.xlu0 %v688
        %v690 = vpop.xlane.xlu0 %689
        %v691 = vsel %vm279, %v663, -inf
        %692 = vmax.xlane.f32.xlu0 %v691
        %v693 = vpop.xlane.xlu0 %692
        %v694 = vsel %vm279, %v668, -inf
        %695 = vmax.xlane.f32.xlu0 %v694
        %v696 = vpop.xlane.xlu0 %695
        %v697 = vsel %vm279, %v671, -inf
        %698 = vmax.xlane.f32.xlu0 %v697
        %v699 = vpop.xlane.xlu0 %698
        %v700 = vsel %vm279, %v676, -inf
        %701 = vmax.xlane.f32.xlu0 %v700
        %v702 = vpop.xlane.xlu0 %701
        %v703 = vsel %vm279, %v679, -inf
        %704 = vmax.xlane.f32.xlu0 %v703
        %v705 = vpop.xlane.xlu0 %704
        %v706 = vsub.f32 %v652, %v684
        %v707 = vsub.f32 %v655, %v687
        %v708 = vsub.f32 %v660, %v690
        %v709 = vsub.f32 %v663, %v693
        %v710 = vsub.f32 %v668, %v696
        %v711 = vsub.f32 %v671, %v699
        %v712 = vsub.f32 %v676, %v702
        %v713 = vsub.f32 %v679, %v705
        %v714 = vmul.f32 %v706, 1.442695
        %v715 = vpow.pop %v714
        %v716 = vmul.f32 %v707, 1.442695
        %v717 = vpow.pop %v716
        %v718 = vmul.f32 %v708, 1.442695
        %v719 = vpow.pop %v718
        %v720 = vmul.f32 %v709, 1.442695
        %v721 = vpow.pop %v720
        %v722 = vmul.f32 %v710, 1.442695
        %v723 = vpow.pop %v722
        %v724 = vmul.f32 %v711, 1.442695
        %v725 = vpow.pop %v724
        %v726 = vmul.f32 %v712, 1.442695
        %v727 = vpow.pop %v726
        %v728 = vmul.f32 %v713, 1.442695
        %v729 = vpow.pop %v728
        %v730 = vsel %vm279, %v715, 0.0
        %731 = vadd.xlane.f32.xlu0 %v730
        %v732 = vpop.xlane.xlu0 %731
        %v733 = vsel %vm279, %v717, 0.0
        %734 = vadd.xlane.f32.xlu0 %v733
        %v735 = vpop.xlane.xlu0 %734
        %v736 = vsel %vm279, %v719, 0.0
        %737 = vadd.xlane.f32.xlu0 %v736
        %v738 = vpop.xlane.xlu0 %737
        %v739 = vsel %vm279, %v721, 0.0
        %740 = vadd.xlane.f32.xlu0 %v739
        %v741 = vpop.xlane.xlu0 %740
        %v742 = vsel %vm279, %v723, 0.0
        %743 = vadd.xlane.f32.xlu0 %v742
        %v744 = vpop.xlane.xlu0 %743
        %v745 = vsel %vm279, %v725, 0.0
        %746 = vadd.xlane.f32.xlu0 %v745
        %v747 = vpop.xlane.xlu0 %746
        %v748 = vsel %vm279, %v727, 0.0
        %749 = vadd.xlane.f32.xlu0 %v748
        %v750 = vpop.xlane.xlu0 %749
        %v751 = vsel %vm279, %v729, 0.0
        %752 = vadd.xlane.f32.xlu0 %v751
        %v753 = vpop.xlane.xlu0 %752
        %v754 = vrcp.pop %v732
        %v755 = vrcp.pop %v735
        %v756 = vrcp.pop %v738
        %v757 = vrcp.pop %v741
        %v758 = vrcp.pop %v744
        %v759 = vrcp.pop %v747
        %v760 = vrcp.pop %v750
        %v761 = vrcp.pop %v753
        %v762 = vmul.f32 %v715, %v754
        %v763 = vmul.f32 %v717, %v755
        %v764 = vmul.f32 %v719, %v756
        %v765 = vmul.f32 %v721, %v757
        %v766 = vmul.f32 %v723, %v758
        %v767 = vmul.f32 %v725, %v759
        %v768 = vmul.f32 %v727, %v760
        %v769 = vmul.f32 %v729, %v761
        %v770 = vpack.c.bf16 %v763, %v762
        %v771 = vpack.c.bf16 %v765, %v764
        %v772 = vpack.c.bf16 %v767, %v766
        %v773 = vpack.c.bf16 %v769, %v768
        %v775 = vsel %vm279, %v770, 0
        %v778 = vsel %vm279, %v771, 0
        %v781 = vsel %vm279, %v772, 0
        %v784 = vsel %vm279, %v773, 0
        %786 = vmatprep.subr.bf16.mxu0 0
        %787 = vmatpush1.bf16.msra.mxu0 %v568
        %788 = vmatprep.subr.bf16.mxu0 0
        %789 = vmatpush1.bf16.msra.mxu0 %v569
        %790 = vmatprep.subr.bf16.mxu0 0
        %791 = vmatpush1.bf16.msra.mxu0 %v570
        %792 = vmatprep.subr.bf16.mxu0 0
        %793 = vmatpush1.bf16.msra.mxu0 %v571
        %794 = vmatprep.subr.bf16.mxu0 0
        %795 = vmatpush1.bf16.msra.mxu0 0
        %796 = vmatprep.subr.bf16.mxu0 0
        %797 = vmatpush1.bf16.msra.mxu0 0
        %798 = vmatprep.subr.bf16.mxu0 0
        %799 = vmatpush1.bf16.msra.mxu0 0
        %800 = vmatprep.subr.bf16.mxu0 0
        %801 = vmatpush1.bf16.msra.mxu0 0
        %802 = vmatprep.subr.bf16.mxu0 0
        %803 = vmatpush1.bf16.msra.mxu0 0
        %804 = vmatprep.subr.bf16.mxu0 0
        %805 = vmatpush1.bf16.msra.mxu0 0
        %806 = vmatprep.subr.bf16.mxu0 0
        %807 = vmatpush1.bf16.msra.mxu0 0
        %808 = vmatprep.subr.bf16.mxu0 0
        %809 = vmatpush1.bf16.msra.mxu0 0
        %810 = vmatprep.subr.bf16.mxu0 0
        %811 = vmatpush1.bf16.msra.mxu0 0
        %812 = vmatprep.subr.bf16.mxu0 0
        %813 = vmatpush1.bf16.msra.mxu0 0
        %814 = vmatprep.subr.bf16.mxu0 0
        %815 = vmatpush1.bf16.msra.mxu0 0
        %816 = vmatprep.subr.bf16.mxu0 0
        %817 = vmatpush1.bf16.msra.mxu0 0
        %818 = vmatprep.mubr.bf16.mxu0 0
        %819 = vmatmul.mubr.bf16.gmra.mrb[0].mxu0 %v775
        %v820 = vpop.f32.mrb[0].mxu0
        %v821 = vadd.f32 0.0, %v820
        %v822 = vpop.f32.mrb[0].mxu0
        %v823 = vpop.f32.mrb[0].mxu0
        %v824 = vadd.f32 0.0, %v823
        %v825 = vpop.f32.mrb[0].mxu0
        %826 = vmatprep.mubr.bf16.mxu0 0
        %827 = vmatmul.mubr.bf16.gmra.mrb[0].mxu0 %v778
        %v828 = vpop.f32.mrb[0].mxu0
        %v829 = vadd.f32 0.0, %v828
        %v830 = vpop.f32.mrb[0].mxu0
        %v831 = vpop.f32.mrb[0].mxu0
        %v832 = vadd.f32 0.0, %v831
        %v833 = vpop.f32.mrb[0].mxu0
        %834 = vmatprep.mubr.bf16.mxu0 0
        %835 = vmatmul.mubr.bf16.gmra.mrb[0].mxu0 %v781
        %v836 = vpop.f32.mrb[0].mxu0
        %v837 = vadd.f32 0.0, %v836
        %v838 = vpop.f32.mrb[0].mxu0
        %v839 = vpop.f32.mrb[0].mxu0
        %v840 = vadd.f32 0.0, %v839
        %v841 = vpop.f32.mrb[0].mxu0
        %842 = vmatprep.mubr.bf16.mxu0 0
        %843 = vmatmul.mubr.bf16.gmra.mrb[0].mxu0 %v784
        %v844 = vpop.f32.mrb[0].mxu0
        %v845 = vadd.f32 0.0, %v844
        %v846 = vpop.f32.mrb[0].mxu0
        %v847 = vpop.f32.mrb[0].mxu0
        %v848 = vadd.f32 0.0, %v847
        %v849 = vpop.f32.mrb[0].mxu0
        %850 = vdwg.mxu0
        %s851 = scalar_lea.vmem %s5, 64
        %v852 = vld [vmem:[%s851] sm:$0xff]
        %v853 = vld [vmem:[%s851 + $0x8] sm:$0xff]
        %v854 = vld [vmem:[%s851 + $0x10] sm:$0xff]
        %v855 = vld [vmem:[%s851 + $0x18] sm:$0xff]
        %v856 = vld [vmem:[%s851 + $0x20] sm:$0xff]
        %v857 = vld [vmem:[%s851 + $0x28] sm:$0xff]
        %v858 = vld [vmem:[%s851 + $0x30] sm:$0xff]
        %v859 = vld [vmem:[%s851 + $0x38] sm:$0xff]
        %864 = vrot.lane.b32.xlu0 %v560, 96
        %v865 = vpop.permute.xlu0 %864
        %866 = vrot.lane.b32.xlu0 %v561, 96
        %v867 = vpop.permute.xlu0 %866
        %868 = vrot.lane.b32.xlu0 %v562, 96
        %v869 = vpop.permute.xlu0 %868
        %870 = vrot.lane.b32.xlu0 %v563, 96
        %v871 = vpop.permute.xlu0 %870
        %872 = vrot.lane.b32.xlu0 %v564, 32
        %v873 = vpop.permute.xlu0 %872
        %874 = vrot.lane.b32.xlu0 %v565, 32
        %v875 = vpop.permute.xlu0 %874
        %876 = vrot.lane.b32.xlu0 %v566, 32
        %v877 = vpop.permute.xlu0 %876
        %878 = vrot.lane.b32.xlu0 %v567, 32
        %v879 = vpop.permute.xlu0 %878
        %v881 = vsel %vm592, %v865, 0
        %v884 = vsel %vm592, %v867, 0
        %v887 = vsel %vm592, %v869, 0
        %v890 = vsel %vm592, %v871, 0
        %v893 = vsel %vm592, %v873, 0
        %v896 = vsel %vm592, %v875, 0
        %v899 = vsel %vm592, %v877, 0
        %v902 = vsel %vm592, %v879, 0
        %904 = vmatprep.subr.bf16.mxu0 0
        %905 = vmatpush1.bf16.xpose.msra.mxu0 %v893
        %906 = vmatprep.subr.bf16.mxu0 0
        %907 = vmatpush1.bf16.xpose.msra.mxu0 %v896
        %908 = vmatprep.subr.bf16.mxu0 0
        %909 = vmatpush1.bf16.xpose.msra.mxu0 %v899
        %910 = vmatprep.subr.bf16.mxu0 0
        %911 = vmatpush1.bf16.xpose.msra.mxu0 %v902
        %912 = vmatprep.subr.bf16.mxu0 0
        %913 = vmatpush1.bf16.xpose.msra.mxu0 0
        %914 = vmatprep.subr.bf16.mxu0 0
        %915 = vmatpush1.bf16.xpose.msra.mxu0 0
        %916 = vmatprep.subr.bf16.mxu0 0
        %917 = vmatpush1.bf16.xpose.msra.mxu0 0
        %918 = vmatprep.subr.bf16.mxu0 0
        %919 = vmatpush1.bf16.xpose.msra.mxu0 0
        %920 = vmatprep.subr.bf16.mxu0 0
        %921 = vmatpush1.bf16.xpose.msra.mxu0 0
        %922 = vmatprep.subr.bf16.mxu0 0
        %923 = vmatpush1.bf16.xpose.msra.mxu0 0
        %924 = vmatprep.subr.bf16.mxu0 0
        %925 = vmatpush1.bf16.xpose.msra.mxu0 0
        %926 = vmatprep.subr.bf16.mxu0 0
        %927 = vmatpush1.bf16.xpose.msra.mxu0 0
        %928 = vmatprep.subr.bf16.mxu0 0
        %929 = vmatpush1.bf16.xpose.msra.mxu0 0
        %930 = vmatprep.subr.bf16.mxu0 0
        %931 = vmatpush1.bf16.xpose.msra.mxu0 0
        %932 = vmatprep.subr.bf16.mxu0 0
        %933 = vmatpush1.bf16.xpose.msra.mxu0 0
        %934 = vmatprep.subr.bf16.mxu0 0
        %935 = vmatpush1.bf16.xpose.msra.mxu0 0
        %936 = vmatprep.mubr.bf16.mxu0 0
        %937 = vmatmul.mubr.bf16.gmra.mrb[0].mxu0 %v881
        %v938 = vpop.f32.mrb[0].mxu0
        %v939 = vadd.f32 %v852, %v938
        %v940 = vpop.f32.mrb[0].mxu0
        %v941 = vpop.f32.mrb[0].mxu0
        %v942 = vadd.f32 %v853, %v941
        %v943 = vpop.f32.mrb[0].mxu0
        %944 = vmatprep.mubr.bf16.mxu0 0
        %945 = vmatmul.mubr.bf16.gmra.mrb[0].mxu0 %v884
        %v946 = vpop.f32.mrb[0].mxu0
        %v947 = vadd.f32 %v854, %v946
        %v948 = vpop.f32.mrb[0].mxu0
        %v949 = vpop.f32.mrb[0].mxu0
        %v950 = vadd.f32 %v855, %v949
        %v951 = vpop.f32.mrb[0].mxu0
        %952 = vmatprep.mubr.bf16.mxu0 0
        %953 = vmatmul.mubr.bf16.gmra.mrb[0].mxu0 %v887
        %v954 = vpop.f32.mrb[0].mxu0
        %v955 = vadd.f32 %v856, %v954
        %v956 = vpop.f32.mrb[0].mxu0
        %v957 = vpop.f32.mrb[0].mxu0
        %v958 = vadd.f32 %v857, %v957
        %v959 = vpop.f32.mrb[0].mxu0
        %960 = vmatprep.mubr.bf16.mxu0 0
        %961 = vmatmul.mubr.bf16.gmra.mrb[0].mxu0 %v890
        %v962 = vpop.f32.mrb[0].mxu0
        %v963 = vadd.f32 %v858, %v962
        %v964 = vpop.f32.mrb[0].mxu0
        %v965 = vpop.f32.mrb[0].mxu0
        %v966 = vadd.f32 %v859, %v965
        %v967 = vpop.f32.mrb[0].mxu0
        %968 = vdwg.mxu0
        %v969 = vsel %vm279, %v939, -inf
        %970 = vmax.xlane.f32.xlu0 %v969
        %v971 = vpop.xlane.xlu0 %970
        %v972 = vsel %vm279, %v942, -inf
        %973 = vmax.xlane.f32.xlu0 %v972
        %v974 = vpop.xlane.xlu0 %973
        %v975 = vsel %vm279, %v947, -inf
        %976 = vmax.xlane.f32.xlu0 %v975
        %v977 = vpop.xlane.xlu0 %976
        %v978 = vsel %vm279, %v950, -inf
        %979 = vmax.xlane.f32.xlu0 %v978
        %v980 = vpop.xlane.xlu0 %979
        %v981 = vsel %vm279, %v955, -inf
        %982 = vmax.xlane.f32.xlu0 %v981
        %v983 = vpop.xlane.xlu0 %982
        %v984 = vsel %vm279, %v958, -inf
        %985 = vmax.xlane.f32.xlu0 %v984
        %v986 = vpop.xlane.xlu0 %985
        %v987 = vsel %vm279, %v963, -inf
        %988 = vmax.xlane.f32.xlu0 %v987
        %v989 = vpop.xlane.xlu0 %988
        %v990 = vsel %vm279, %v966, -inf
        %991 = vmax.xlane.f32.xlu0 %v990
        %v992 = vpop.xlane.xlu0 %991
        %v993 = vsub.f32 %v939, %v971
        %v994 = vsub.f32 %v942, %v974
        %v995 = vsub.f32 %v947, %v977
        %v996 = vsub.f32 %v950, %v980
        %v997 = vsub.f32 %v955, %v983
        %v998 = vsub.f32 %v958, %v986
        %v999 = vsub.f32 %v963, %v989
        %v1000 = vsub.f32 %v966, %v992
        %v1001 = vmul.f32 %v993, 1.442695
        %v1002 = vpow.pop %v1001
        %v1003 = vmul.f32 %v994, 1.442695
        %v1004 = vpow.pop %v1003
        %v1005 = vmul.f32 %v995, 1.442695
        %v1006 = vpow.pop %v1005
        %v1007 = vmul.f32 %v996, 1.442695
        %v1008 = vpow.pop %v1007
        %v1009 = vmul.f32 %v997, 1.442695
        %v1010 = vpow.pop %v1009
        %v1011 = vmul.f32 %v998, 1.442695
        %v1012 = vpow.pop %v1011
        %v1013 = vmul.f32 %v999, 1.442695
        %v1014 = vpow.pop %v1013
        %v1015 = vmul.f32 %v1000, 1.442695
        %v1016 = vpow.pop %v1015
        %v1017 = vsel %vm279, %v1002, 0.0
        %1018 = vadd.xlane.f32.xlu0 %v1017
        %v1019 = vpop.xlane.xlu0 %1018
        %v1020 = vsel %vm279, %v1004, 0.0
        %1021 = vadd.xlane.f32.xlu0 %v1020
        %v1022 = vpop.xlane.xlu0 %1021
        %v1023 = vsel %vm279, %v1006, 0.0
        %1024 = vadd.xlane.f32.xlu0 %v1023
        %v1025 = vpop.xlane.xlu0 %1024
        %v1026 = vsel %vm279, %v1008, 0.0
        %1027 = vadd.xlane.f32.xlu0 %v1026
        %v1028 = vpop.xlane.xlu0 %1027
        %v1029 = vsel %vm279, %v1010, 0.0
        %1030 = vadd.xlane.f32.xlu0 %v1029
        %v1031 = vpop.xlane.xlu0 %1030
        %v1032 = vsel %vm279, %v1012, 0.0
        %1033 = vadd.xlane.f32.xlu0 %v1032
        %v1034 = vpop.xlane.xlu0 %1033
        %v1035 = vsel %vm279, %v1014, 0.0
        %1036 = vadd.xlane.f32.xlu0 %v1035
        %v1037 = vpop.xlane.xlu0 %1036
        %v1038 = vsel %vm279, %v1016, 0.0
        %1039 = vadd.xlane.f32.xlu0 %v1038
        %v1040 = vpop.xlane.xlu0 %1039
        %v1041 = vrcp.pop %v1019
        %v1042 = vrcp.pop %v1022
        %v1043 = vrcp.pop %v1025
        %v1044 = vrcp.pop %v1028
        %v1045 = vrcp.pop %v1031
        %v1046 = vrcp.pop %v1034
        %v1047 = vrcp.pop %v1037
        %v1048 = vrcp.pop %v1040
        %v1049 = vmul.f32 %v1002, %v1041
        %v1050 = vmul.f32 %v1004, %v1042
        %v1051 = vmul.f32 %v1006, %v1043
        %v1052 = vmul.f32 %v1008, %v1044
        %v1053 = vmul.f32 %v1010, %v1045
        %v1054 = vmul.f32 %v1012, %v1046
        %v1055 = vmul.f32 %v1014, %v1047
        %v1056 = vmul.f32 %v1016, %v1048
        %v1057 = vpack.c.bf16 %v1050, %v1049
        %v1058 = vpack.c.bf16 %v1052, %v1051
        %v1059 = vpack.c.bf16 %v1054, %v1053
        %v1060 = vpack.c.bf16 %v1056, %v1055
        %1065 = vrot.lane.b32.xlu0 %v568, 96
        %v1066 = vpop.permute.xlu0 %1065
        %1067 = vrot.lane.b32.xlu0 %v569, 96
        %v1068 = vpop.permute.xlu0 %1067
        %1069 = vrot.lane.b32.xlu0 %v570, 96
        %v1070 = vpop.permute.xlu0 %1069
        %1071 = vrot.lane.b32.xlu0 %v571, 96
        %v1072 = vpop.permute.xlu0 %1071
        %v1078 = vsel %vm279, %v1057, 0
        %v1081 = vsel %vm279, %v1058, 0
        %v1084 = vsel %vm279, %v1059, 0
        %v1087 = vsel %vm279, %v1060, 0
        %1089 = vmatprep.subr.bf16.mxu0 0
        %1090 = vmatpush1.bf16.msra.mxu0 %v1066
        %1091 = vmatprep.subr.bf16.mxu0 0
        %1092 = vmatpush1.bf16.msra.mxu0 %v1068
        %1093 = vmatprep.subr.bf16.mxu0 0
        %1094 = vmatpush1.bf16.msra.mxu0 %v1070
        %1095 = vmatprep.subr.bf16.mxu0 0
        %1096 = vmatpush1.bf16.msra.mxu0 %v1072
        %1097 = vmatprep.subr.bf16.mxu0 0
        %1098 = vmatpush1.bf16.msra.mxu0 0
        %1099 = vmatprep.subr.bf16.mxu0 0
        %1100 = vmatpush1.bf16.msra.mxu0 0
        %1101 = vmatprep.subr.bf16.mxu0 0
        %1102 = vmatpush1.bf16.msra.mxu0 0
        %1103 = vmatprep.subr.bf16.mxu0 0
        %1104 = vmatpush1.bf16.msra.mxu0 0
        %1105 = vmatprep.subr.bf16.mxu0 0
        %1106 = vmatpush1.bf16.msra.mxu0 0
        %1107 = vmatprep.subr.bf16.mxu0 0
        %1108 = vmatpush1.bf16.msra.mxu0 0
        %1109 = vmatprep.subr.bf16.mxu0 0
        %1110 = vmatpush1.bf16.msra.mxu0 0
        %1111 = vmatprep.subr.bf16.mxu0 0
        %1112 = vmatpush1.bf16.msra.mxu0 0
        %1113 = vmatprep.subr.bf16.mxu0 0
        %1114 = vmatpush1.bf16.msra.mxu0 0
        %1115 = vmatprep.subr.bf16.mxu0 0
        %1116 = vmatpush1.bf16.msra.mxu0 0
        %1117 = vmatprep.subr.bf16.mxu0 0
        %1118 = vmatpush1.bf16.msra.mxu0 0
        %1119 = vmatprep.subr.bf16.mxu0 0
        %1120 = vmatpush1.bf16.msra.mxu0 0
        %1121 = vmatprep.mubr.bf16.mxu0 0
        %1122 = vmatmul.mubr.bf16.gmra.mrb[0].mxu0 %v1078
        %v1123 = vpop.f32.mrb[0].mxu0
        %v1124 = vadd.f32 0.0, %v1123
        %v1125 = vpop.f32.mrb[0].mxu0
        %v1126 = vpop.f32.mrb[0].mxu0
        %v1127 = vadd.f32 0.0, %v1126
        %v1128 = vpop.f32.mrb[0].mxu0
        %1129 = vmatprep.mubr.bf16.mxu0 0
        %1130 = vmatmul.mubr.bf16.gmra.mrb[0].mxu0 %v1081
        %v1131 = vpop.f32.mrb[0].mxu0
        %v1132 = vadd.f32 0.0, %v1131
        %v1133 = vpop.f32.mrb[0].mxu0
        %v1134 = vpop.f32.mrb[0].mxu0
        %v1135 = vadd.f32 0.0, %v1134
        %v1136 = vpop.f32.mrb[0].mxu0
        %1137 = vmatprep.mubr.bf16.mxu0 0
        %1138 = vmatmul.mubr.bf16.gmra.mrb[0].mxu0 %v1084
        %v1139 = vpop.f32.mrb[0].mxu0
        %v1140 = vadd.f32 0.0, %v1139
        %v1141 = vpop.f32.mrb[0].mxu0
        %v1142 = vpop.f32.mrb[0].mxu0
        %v1143 = vadd.f32 0.0, %v1142
        %v1144 = vpop.f32.mrb[0].mxu0
        %1145 = vmatprep.mubr.bf16.mxu0 0
        %1146 = vmatmul.mubr.bf16.gmra.mrb[0].mxu0 %v1087
        %v1147 = vpop.f32.mrb[0].mxu0
        %v1148 = vadd.f32 0.0, %v1147
        %v1149 = vpop.f32.mrb[0].mxu0
        %v1150 = vpop.f32.mrb[0].mxu0
        %v1151 = vadd.f32 0.0, %v1150
        %v1152 = vpop.f32.mrb[0].mxu0
        %1153 = vdwg.mxu0
        %1162 = vrot.lane.b32.xlu0 %v1124, 32
        %v1163 = vpop.permute.xlu0 %1162
        %1164 = vrot.lane.b32.xlu0 %v1127, 32
        %v1165 = vpop.permute.xlu0 %1164
        %1166 = vrot.lane.b32.xlu0 %v1132, 32
        %v1167 = vpop.permute.xlu0 %1166
        %1168 = vrot.lane.b32.xlu0 %v1135, 32
        %v1169 = vpop.permute.xlu0 %1168
        %1170 = vrot.lane.b32.xlu0 %v1140, 32
        %v1171 = vpop.permute.xlu0 %1170
        %1172 = vrot.lane.b32.xlu0 %v1143, 32
        %v1173 = vpop.permute.xlu0 %1172
        %1174 = vrot.lane.b32.xlu0 %v1148, 32
        %v1175 = vpop.permute.xlu0 %1174
        %1176 = vrot.lane.b32.xlu0 %v1151, 32
        %v1177 = vpop.permute.xlu0 %1176
        %v1186 = vsel %vm592, %v821, %v1163
        %v1187 = vsel %vm592, %v824, %v1165
        %v1188 = vsel %vm592, %v829, %v1167
        %v1189 = vsel %vm592, %v832, %v1169
        %v1190 = vsel %vm592, %v837, %v1171
        %v1191 = vsel %vm592, %v840, %v1173
        %v1192 = vsel %vm592, %v845, %v1175
        %v1193 = vsel %vm592, %v848, %v1177
        %v1194 = vpack.c.bf16 %v1187, %v1186
        %v1195 = vpack.c.bf16 %v1189, %v1188
        %v1196 = vpack.c.bf16 %v1191, %v1190
        %v1197 = vpack.c.bf16 %v1193, %v1192
        %v1198 = vld [vmem:[#allocation2] sm:$0xf]
        %v1199 = vld [vmem:[#allocation2 + $0x4] sm:$0xf]
        %v1200 = vld [vmem:[#allocation2 + $0x8] sm:$0xf]
        %v1201 = vld [vmem:[#allocation2 + $0xc] sm:$0xf]
        %v1202 = vld [vmem:[#allocation2 + $0x10] sm:$0xf]
        %v1203 = vld [vmem:[#allocation2 + $0x14] sm:$0xf]
        %v1204 = vld [vmem:[#allocation2 + $0x18] sm:$0xf]
        %v1205 = vld [vmem:[#allocation2 + $0x1c] sm:$0xf]
        %v1214 = vunpack.c.l.b16 %v1198
        %v1215 = vunpack.c.l.b16 %v1199
        %v1216 = vunpack.c.l.b16 %v1200
        %v1217 = vunpack.c.l.b16 %v1201
        %v1218 = vunpack.c.l.b16 %v1202
        %v1219 = vunpack.c.l.b16 %v1203
        %v1220 = vunpack.c.l.b16 %v1204
        %v1221 = vunpack.c.l.b16 %v1205
        %v1222 = vpack.c.b16 %v1215, %v1214
        %v1223 = vpack.c.b16 %v1217, %v1216
        %v1224 = vpack.c.b16 %v1219, %v1218
        %v1225 = vpack.c.b16 %v1221, %v1220
        %v1231 = vsel %vm279, %v1194, 0
        %v1234 = vsel %vm279, %v1195, 0
        %v1237 = vsel %vm279, %v1196, 0
        %v1240 = vsel %vm279, %v1197, 0
        %1242 = vmatprep.subr.bf16.mxu0 0
        %1243 = vmatpush1.bf16.msra.mxu0 %v1222
        %1244 = vmatprep.subr.bf16.mxu0 0
        %1245 = vmatpush1.bf16.msra.mxu0 %v1223
        %1246 = vmatprep.subr.bf16.mxu0 0
        %1247 = vmatpush1.bf16.msra.mxu0 %v1224
        %1248 = vmatprep.subr.bf16.mxu0 0
        %1249 = vmatpush1.bf16.msra.mxu0 %v1225
        %1250 = vmatprep.subr.bf16.mxu0 0
        %1251 = vmatpush1.bf16.msra.mxu0 0
        %1252 = vmatprep.subr.bf16.mxu0 0
        %1253 = vmatpush1.bf16.msra.mxu0 0
        %1254 = vmatprep.subr.bf16.mxu0 0
        %1255 = vmatpush1.bf16.msra.mxu0 0
        %1256 = vmatprep.subr.bf16.mxu0 0
        %1257 = vmatpush1.bf16.msra.mxu0 0
        %1258 = vmatprep.subr.bf16.mxu0 0
        %1259 = vmatpush1.bf16.msra.mxu0 0
        %1260 = vmatprep.subr.bf16.mxu0 0
        %1261 = vmatpush1.bf16.msra.mxu0 0
        %1262 = vmatprep.subr.bf16.mxu0 0
        %1263 = vmatpush1.bf16.msra.mxu0 0
        %1264 = vmatprep.subr.bf16.mxu0 0
        %1265 = vmatpush1.bf16.msra.mxu0 0
        %1266 = vmatprep.subr.bf16.mxu0 0
        %1267 = vmatpush1.bf16.msra.mxu0 0
        %1268 = vmatprep.subr.bf16.mxu0 0
        %1269 = vmatpush1.bf16.msra.mxu0 0
        %1270 = vmatprep.subr.bf16.mxu0 0
        %1271 = vmatpush1.bf16.msra.mxu0 0
        %1272 = vmatprep.subr.bf16.mxu0 0
        %1273 = vmatpush1.bf16.msra.mxu0 0
        %1274 = vmatprep.mubr.bf16.mxu0 0
        %1275 = vmatmul.mubr.bf16.gmra.mrb[0].mxu0 %v1231
        %v1276 = vpop.f32.mrb[0].mxu0
        %v1277 = vadd.f32 0.0, %v1276
        %v1278 = vpop.f32.mrb[0].mxu0
        %v1279 = vpop.f32.mrb[0].mxu0
        %v1280 = vadd.f32 0.0, %v1279
        %v1281 = vpop.f32.mrb[0].mxu0
        %1282 = vmatprep.mubr.bf16.mxu0 0
        %1283 = vmatmul.mubr.bf16.gmra.mrb[0].mxu0 %v1234
        %v1284 = vpop.f32.mrb[0].mxu0
        %v1285 = vadd.f32 0.0, %v1284
        %v1286 = vpop.f32.mrb[0].mxu0
        %v1287 = vpop.f32.mrb[0].mxu0
        %v1288 = vadd.f32 0.0, %v1287
        %v1289 = vpop.f32.mrb[0].mxu0
        %1290 = vmatprep.mubr.bf16.mxu0 0
        %1291 = vmatmul.mubr.bf16.gmra.mrb[0].mxu0 %v1237
        %v1292 = vpop.f32.mrb[0].mxu0
        %v1293 = vadd.f32 0.0, %v1292
        %v1294 = vpop.f32.mrb[0].mxu0
        %v1295 = vpop.f32.mrb[0].mxu0
        %v1296 = vadd.f32 0.0, %v1295
        %v1297 = vpop.f32.mrb[0].mxu0
        %1298 = vmatprep.mubr.bf16.mxu0 0
        %1299 = vmatmul.mubr.bf16.gmra.mrb[0].mxu0 %v1240
        %v1300 = vpop.f32.mrb[0].mxu0
        %v1301 = vadd.f32 0.0, %v1300
        %v1302 = vpop.f32.mrb[0].mxu0
        %v1303 = vpop.f32.mrb[0].mxu0
        %v1304 = vadd.f32 0.0, %v1303
        %v1305 = vpop.f32.mrb[0].mxu0
        %1306 = vdwg.mxu0
        %1307 = vst.msk [vmem:[%s268] sm:$0xff] %vm279, %v1277
        %1308 = vst.msk [vmem:[%s268 + $0x8] sm:$0xff] %vm279, %v1280
        %1309 = vst.msk [vmem:[%s268 + $0x10] sm:$0xff] %vm279, %v1285
        %1310 = vst.msk [vmem:[%s268 + $0x18] sm:$0xff] %vm279, %v1288
        %1311 = vst.msk [vmem:[%s268 + $0x20] sm:$0xff] %vm279, %v1293
        %1312 = vst.msk [vmem:[%s268 + $0x28] sm:$0xff] %vm279, %v1296
        %1313 = vst.msk [vmem:[%s268 + $0x30] sm:$0xff] %vm279, %v1301
        %1314 = vst.msk [vmem:[%s268 + $0x38] sm:$0xff] %vm279, %v1304
        %s1315 = smul.u32 8, %s18
        %p1316 = scmp.lt.s32.totalorder %s1315, 15
        %s1317 = scalar_select %p1316, %s1315, 15
        %s1318 = smul.addr %s1317, 8
        %s1319 = scalar_lea.vmem %s6, %s1318
        // Predicated region
        $region49: #{tpu_custom_call.1} parent=43 // pred_check
          %p1320 = pneg %p167
        $region50: #{tpu_custom_call.1} parent=43 // pred_check_branch
          %1322 = sbr.rel (%p1320) target = $region52
        $region51: #{tpu_custom_call.1} parent=43 // pred_region
          %s1323 = smul.u32 8, %s18
        $region52: #{tpu_custom_call.1} parent=43 // pred_fallthru
          _
      $region44: #{tpu_custom_call.1} parent=5 // pred_fallthru
        _
      %p1324 = scmp.le.s32.totalorder 2, %s13
      // Predicated region
      $region53: #{tpu_custom_call.1} parent=5 // pred_check
        %p1325 = pneg %p1324
      $region54: #{tpu_custom_call.1} parent=5 // pred_check_branch
        %1327 = sbr.rel (%p1325) target = $region56
      $region55: #{tpu_custom_call.1} parent=5 // pred_region
        %s1328 = ssub.s32 %s13, 2
        // Predicated region
        $region57: #{tpu_custom_call.1} parent=55 // pred_check
          %p1329 = pneg %p173
        $region58: #{tpu_custom_call.1} parent=55 // pred_check_branch
          %1331 = sbr.rel (%p1329) target = $region60
        $region59: #{tpu_custom_call.1} parent=55 // pred_region
          %s1332 = smul.u32 8, %s19
          %p1333 = scmp.lt.s32.totalorder %s1332, 15
          %s1334 = scalar_select %p1333, %s1332, 15
          %s1335 = smul.addr %s1334, 8
          %s1336 = scalar_lea.vmem %s6, %s1335
        $region60: #{tpu_custom_call.1} parent=55 // pred_fallthru
          _
      $region56: #{tpu_custom_call.1} parent=5 // pred_fallthru
        _
    $region6: #{tpu_custom_call.1} parent=1 // loop_footer
      %s17 = sadd.s32 1, %s13
    $region7: #{tpu_custom_call.1} parent=1 // loop_footer_branch
      %12 = sbr.rel target = $region3
    $region8: #{tpu_custom_call.1} parent=1 // loop_exit
      _
    %1337 = vsyncpa [#allocation3], 1
    %s1338 = scalar_lea.sflag [#allocation3], 1
    %1339 = vsyncpa %s1338, 1

</llo_original>
